<compile_context>
chip_gen: v7x
topology: tpu7x:2x2x1
jax: 0.10.0
libtpu: 0.0.40
codegen_flags: <defaults>
</compile_context>

<pallas_src>
import jax
import jax.numpy as jnp
from jax.experimental import pallas as pl
from jax.experimental.pallas import tpu as pltpu

BN_EPS = 1e-5


def resnet_block_kernel(x_ref, t1_ref, b1_ref, t2_ref, b2_ref, t3_ref, b3_ref,
                        g_ref, bt_ref, r_ref, bc_ref, out_ref, pad_ref):
    H, L = x_ref.shape            # L = N*W*C packed lanes (128 at toy shape)
    C = r_ref.shape[1]

    # Zero ONLY the two vertical-halo rows of the padded scratch, once.
    # Interior rows are fully rewritten before every conv reads them, and the
    # horizontal SAME-padding lives inside the Toeplitz weights (no halo lanes).
    zrow = jnp.zeros((1, L), jnp.float32)
    pad_ref[0:1, :] = zrow
    pad_ref[H + 1:H + 2, :] = zrow

    def conv3x3(act, t_ref, brow_ref):
        # Lane-offset-0, leading-axis interior write (rows 1..H).
        pad_ref[1:H + 1, :] = act
        # One MXU matmul per kh tap; each patch is a plain leading-axis slice
        # of the resident 2-D scratch (no reshape, no copy), K = L.
        acc = jnp.dot(pad_ref[0:H, :], t_ref[0],
                      preferred_element_type=jnp.float32)
        acc = acc + jnp.dot(pad_ref[1:H + 1, :], t_ref[1],
                            preferred_element_type=jnp.float32)
        acc = acc + jnp.dot(pad_ref[2:H + 2, :], t_ref[2],
                            preferred_element_type=jnp.float32)
        return acc + brow_ref[...]            # bias pre-tiled to (1, L)

    x2d = x_ref[...].astype(jnp.float32)

    h = jnp.maximum(conv3x3(x2d, t1_ref, b1_ref), 0.0)
    h = jnp.maximum(conv3x3(h, t2_ref, b2_ref), 0.0)
    h = conv3x3(h, t3_ref, b3_ref)

    # BatchNorm2d (training mode: batch stats, biased variance).
    # Two-pass (shifted) variance; per-channel reduce / broadcast via thin
    # (L, C) and (C, L) matrices so the lane layout is never shuffled.
    count = jnp.float32(H * (L // C))                         # N*H*W per chan
    sum_row = jnp.sum(h, axis=0, keepdims=True)               # (1, L)
    mean_c = jnp.dot(sum_row, r_ref[...],
                     preferred_element_type=jnp.float32) / count      # (1, C)
    mean_row = jnp.dot(mean_c, bc_ref[...],
                       preferred_element_type=jnp.float32)            # (1, L)
    d = h - mean_row
    sq_row = jnp.sum(d * d, axis=0, keepdims=True)            # (1, L)
    var_c = jnp.dot(sq_row, r_ref[...],
                    preferred_element_type=jnp.float32) / count       # (1, C)
    scale_c = g_ref[...] * jax.lax.rsqrt(var_c + BN_EPS)      # EUP rsqrt
    sb = jnp.concatenate([scale_c, bt_ref[...]], axis=0)      # (2, C)
    sb_row = jnp.dot(sb, bc_ref[...],
                     preferred_element_type=jnp.float32)      # (2, L) one push

    # Normalize + residual add + final ReLU; lane-dense 128-wide store.
    out_ref[...] = jnp.maximum(d * sb_row[0:1, :] + sb_row[1:2, :] + x2d,
                               0.0).astype(out_ref.dtype)


def resnet_block(x, params):
    """x: (N, H, W, C) NHWC.  params: HWIO conv weights, (C,) bias/gamma/beta."""
    N, H, W, C = x.shape
    w1, b1, w2, b2, w3, b3, gamma, beta = params
    L = N * W * C                      # packed lane width (n-major, w, c-minor)

    # Width-Toeplitz per kh with horizontal SAME-padding baked in (zero rows
    # for out-of-range kw), made block-diagonal over batch so the (n, w, c)
    # lane packing is handled by a single (L, L) matmul per tap.
    # TODO(synk): cast these (and the activations) to bf16 with f32
    # accumulation when scaling up; negligible at the toy shape.
    def toeplitz(w_hwio):
        eye_n = jnp.eye(N, dtype=jnp.float32)
        mats = []
        for kh in range(3):
            t = jnp.zeros((W * C, W * C), jnp.float32)
            for kw in range(3):
                shift = jnp.eye(W, W, k=-(kw - 1), dtype=jnp.float32)
                t = t + jnp.kron(shift, w_hwio[kh, kw].astype(jnp.float32))
            mats.append(jnp.kron(eye_n, t))                # (L, L)
        return jnp.stack(mats)                             # (3, L, L)

    def tile_row(v):                                       # (C,) -> (1, L)
        return jnp.tile(v.astype(jnp.float32).reshape(1, C), (1, N * W))

    t1, t2, t3 = toeplitz(w1), toeplitz(w2), toeplitz(w3)
    br1, br2, br3 = tile_row(b1), tile_row(b2), tile_row(b3)
    g_row = gamma.astype(jnp.float32).reshape(1, C)
    bt_row = beta.astype(jnp.float32).reshape(1, C)
    # Thin channel reduce / broadcast matrices (O(L*C), not O(L^2)).
    r_ch = jnp.kron(jnp.ones((N * W, 1), jnp.float32),
                    jnp.eye(C, dtype=jnp.float32))          # (L, C)
    bc_ch = r_ch.T                                          # (C, L)

    # Lane-dense slab: batch packed into lanes so the toy C=4 case still
    # fills all 128 lanes (free-ish relayout done once in the wrapper).
    x2d = x.transpose(1, 0, 2, 3).reshape(H, L)

    def full_spec(shape):
        return pl.BlockSpec(shape, lambda *_: (0,) * len(shape))

    out2d = pl.pallas_call(
        resnet_block_kernel,
        out_shape=jax.ShapeDtypeStruct((H, L), jnp.float32),
        grid=(1,),
        in_specs=[full_spec(x2d.shape),
                  full_spec(t1.shape), full_spec(br1.shape),
                  full_spec(t2.shape), full_spec(br2.shape),
                  full_spec(t3.shape), full_spec(br3.shape),
                  full_spec(g_row.shape), full_spec(bt_row.shape),
                  full_spec(r_ch.shape), full_spec(bc_ch.shape)],
        out_specs=full_spec((H, L)),
        scratch_shapes=[pltpu.VMEM((H + 2, L), jnp.float32)],
        compiler_params=pltpu.CompilerParams(dimension_semantics=("arbitrary",)),
    )(x2d, t1, br1, t2, br2, t3, br3, g_row, bt_row, r_ch, bc_ch)

    return out2d.reshape(H, N, W, C).transpose(1, 0, 2, 3)


def resnet_block_ref(x, params):
    """Pure-JAX reference (NHWC) mirroring the PyTorch module in train mode."""
    w1, b1, w2, b2, w3, b3, gamma, beta = params
    dn = ('NHWC', 'HWIO', 'NHWC')

    def conv(h, w, b):
        y = jax.lax.conv_general_dilated(h, w, (1, 1), 'SAME',
                                         dimension_numbers=dn,
                                         precision=jax.lax.Precision.HIGHEST)
        return y + b.reshape(1, 1, 1, -1)

    h = jax.nn.relu(conv(x, w1, b1))
    h = jax.nn.relu(conv(h, w2, b2))
    h = conv(h, w3, b3)
    mean = jnp.mean(h, axis=(0, 1, 2), keepdims=True)
    var = jnp.mean((h - mean) ** 2, axis=(0, 1, 2), keepdims=True)
    h = (h - mean) / jnp.sqrt(var + BN_EPS)
    h = h * gamma.reshape(1, 1, 1, -1) + beta.reshape(1, 1, 1, -1)
    return jax.nn.relu(h + x)


if __name__ == "__main__":
    # Small shapes consistent with the module: batch=2, channels=4, spatial=16.
    N, H, W, C = 2, 16, 16, 4
    key = jax.random.PRNGKey(0)
    kx, k1, k2, k3, kb1, kb2, kb3 = jax.random.split(key, 7)

    # Input (NHWC). Equivalent PyTorch input would be NCHW [2, 4, 16, 16].
    x = jax.random.normal(kx, (N, H, W, C), jnp.float32)

    scale = 0.2
    w1 = scale * jax.random.normal(k1, (3, 3, C, C), jnp.float32)   # HWIO
    w2 = scale * jax.random.normal(k2, (3, 3, C, C), jnp.float32)
    w3 = scale * jax.random.normal(k3, (3, 3, C, C), jnp.float32)
    b1 = 0.1 * jax.random.normal(kb1, (C,), jnp.float32)
    b2 = 0.1 * jax.random.normal(kb2, (C,), jnp.float32)
    b3 = 0.1 * jax.random.normal(kb3, (C,), jnp.float32)
    gamma = jnp.ones((C,), jnp.float32)    # BatchNorm2d default weight init
    beta = jnp.zeros((C,), jnp.float32)    # BatchNorm2d default bias init

    params = (w1, b1, w2, b2, w3, b3, gamma, beta)

    out = jax.block_until_ready(resnet_block(x, params))
    ref = jax.block_until_ready(resnet_block_ref(x, params))

    assert out.shape == (N, H, W, C) and out.dtype == jnp.float32
    err = jnp.max(jnp.abs(out - ref))
    assert jnp.allclose(out, ref, atol=2e-4, rtol=2e-4), f"max abs err = {err}"

    print("KERNEL_OK")
</pallas_src>

<mosaic_0001>
module attributes {stable_mosaic.version = 11 : i64} {
  func.func @resnet_block_kernel(%arg0: i32, %arg1: memref<16x128xf32, #tpu.memory_space<vmem>>, %arg2: memref<3x128x128xf32, #tpu.memory_space<vmem>>, %arg3: memref<1x128xf32, #tpu.memory_space<vmem>>, %arg4: memref<3x128x128xf32, #tpu.memory_space<vmem>>, %arg5: memref<1x128xf32, #tpu.memory_space<vmem>>, %arg6: memref<3x128x128xf32, #tpu.memory_space<vmem>>, %arg7: memref<1x128xf32, #tpu.memory_space<vmem>>, %arg8: memref<1x4xf32, #tpu.memory_space<vmem>>, %arg9: memref<1x4xf32, #tpu.memory_space<vmem>>, %arg10: memref<128x4xf32, #tpu.memory_space<vmem>>, %arg11: memref<4x128xf32, #tpu.memory_space<vmem>>, %arg12: memref<16x128xf32, #tpu.memory_space<vmem>>, %arg13: memref<18x128xf32, #tpu.memory_space<vmem>>) attributes {dimension_semantics = [#tpu.dimension_semantics<arbitrary>], iteration_bounds = array<i64: 1>, scalar_prefetch = 0 : i64, scratch_operands = 1 : i64, tpu.core_type = #tpu.core_type<tc>, window_params = [{pipeline_mode = #tpu.pipeline_mode<synchronous>, transform_indices = @transform_0, window_bounds = array<i64: 16, 128>}, {pipeline_mode = #tpu.pipeline_mode<synchronous>, transform_indices = @transform_1, window_bounds = array<i64: 3, 128, 128>}, {pipeline_mode = #tpu.pipeline_mode<synchronous>, transform_indices = @transform_2, window_bounds = array<i64: 1, 128>}, {pipeline_mode = #tpu.pipeline_mode<synchronous>, transform_indices = @transform_3, window_bounds = array<i64: 3, 128, 128>}, {pipeline_mode = #tpu.pipeline_mode<synchronous>, transform_indices = @transform_4, window_bounds = array<i64: 1, 128>}, {pipeline_mode = #tpu.pipeline_mode<synchronous>, transform_indices = @transform_5, window_bounds = array<i64: 3, 128, 128>}, {pipeline_mode = #tpu.pipeline_mode<synchronous>, transform_indices = @transform_6, window_bounds = array<i64: 1, 128>}, {pipeline_mode = #tpu.pipeline_mode<synchronous>, transform_indices = @transform_7, window_bounds = array<i64: 1, 4>}, {pipeline_mode = #tpu.pipeline_mode<synchronous>, transform_indices = @transform_8, window_bounds = array<i64: 1, 4>}, {pipeline_mode = #tpu.pipeline_mode<synchronous>, transform_indices = @transform_9, window_bounds = array<i64: 128, 4>}, {pipeline_mode = #tpu.pipeline_mode<synchronous>, transform_indices = @transform_10, window_bounds = array<i64: 4, 128>}, {pipeline_mode = #tpu.pipeline_mode<synchronous>, transform_indices = @transform_11, window_bounds = array<i64: 16, 128>}]} {
    %cst = arith.constant 0.000000e+00 : f32
    %0 = vector.broadcast %cst : f32 to vector<1x128xf32>
    %c0 = arith.constant 0 : index
    %c0_0 = arith.constant 0 : index
    %1 = vector.load %arg13[%c0, %c0_0] : memref<18x128xf32, #tpu.memory_space<vmem>>, vector<1x128xf32>
    tpu.vector_store %arg13[%c0, %c0_0], %0 {strides = array<i32>} : memref<18x128xf32, #tpu.memory_space<vmem>>, vector<1x128xf32>,
    %c17 = arith.constant 17 : index
    %c0_1 = arith.constant 0 : index
    %2 = vector.load %arg13[%c17, %c0_1] : memref<18x128xf32, #tpu.memory_space<vmem>>, vector<1x128xf32>
    tpu.vector_store %arg13[%c17, %c0_1], %0 {strides = array<i32>} : memref<18x128xf32, #tpu.memory_space<vmem>>, vector<1x128xf32>,
    %c0_2 = arith.constant 0 : index
    %c0_3 = arith.constant 0 : index
    %3 = vector.load %arg1[%c0_2, %c0_3] : memref<16x128xf32, #tpu.memory_space<vmem>>, vector<16x128xf32>
    %c1 = arith.constant 1 : index
    %c0_4 = arith.constant 0 : index
    %4 = vector.load %arg13[%c1, %c0_4] : memref<18x128xf32, #tpu.memory_space<vmem>>, vector<16x128xf32>
    tpu.vector_store %arg13[%c1, %c0_4], %3 {strides = array<i32>} : memref<18x128xf32, #tpu.memory_space<vmem>>, vector<16x128xf32>,
    %c0_5 = arith.constant 0 : index
    %c0_6 = arith.constant 0 : index
    %5 = vector.load %arg13[%c0_5, %c0_6] : memref<18x128xf32, #tpu.memory_space<vmem>>, vector<16x128xf32>
    %c0_7 = arith.constant 0 : index
    %c0_8 = arith.constant 0 : index
    %c0_9 = arith.constant 0 : index
    %6 = vector.load %arg2[%c0_7, %c0_8, %c0_9] : memref<3x128x128xf32, #tpu.memory_space<vmem>>, vector<1x128x128xf32>
    %7 = vector.shape_cast %6 : vector<1x128x128xf32> to vector<128x128xf32>
    %cst_10 = arith.constant dense<0.000000e+00> : vector<16x128xf32>
    %8 = tpu.matmul %5, %7, %cst_10 {dimension_numbers = #tpu.dot_dimension_numbers<[1], [0], [0], [1], [0, 0, 1, 1], [], []>} : vector<16x128xf32>, vector<128x128xf32>, vector<16x128xf32> -> vector<16x128xf32>
    %c1_11 = arith.constant 1 : index
    %c0_12 = arith.constant 0 : index
    %9 = vector.load %arg13[%c1_11, %c0_12] : memref<18x128xf32, #tpu.memory_space<vmem>>, vector<16x128xf32>
    %c1_13 = arith.constant 1 : index
    %c0_14 = arith.constant 0 : index
    %c0_15 = arith.constant 0 : index
    %10 = vector.load %arg2[%c1_13, %c0_14, %c0_15] : memref<3x128x128xf32, #tpu.memory_space<vmem>>, vector<1x128x128xf32>
    %11 = vector.shape_cast %10 : vector<1x128x128xf32> to vector<128x128xf32>
    %cst_16 = arith.constant dense<0.000000e+00> : vector<16x128xf32>
    %12 = tpu.matmul %9, %11, %cst_16 {dimension_numbers = #tpu.dot_dimension_numbers<[1], [0], [0], [1], [0, 0, 1, 1], [], []>} : vector<16x128xf32>, vector<128x128xf32>, vector<16x128xf32> -> vector<16x128xf32>
    %13 = arith.addf %8, %12 : vector<16x128xf32>
    %c2 = arith.constant 2 : index
    %c0_17 = arith.constant 0 : index
    %14 = vector.load %arg13[%c2, %c0_17] : memref<18x128xf32, #tpu.memory_space<vmem>>, vector<16x128xf32>
    %c2_18 = arith.constant 2 : index
    %c0_19 = arith.constant 0 : index
    %c0_20 = arith.constant 0 : index
    %15 = vector.load %arg2[%c2_18, %c0_19, %c0_20] : memref<3x128x128xf32, #tpu.memory_space<vmem>>, vector<1x128x128xf32>
    %16 = vector.shape_cast %15 : vector<1x128x128xf32> to vector<128x128xf32>
    %cst_21 = arith.constant dense<0.000000e+00> : vector<16x128xf32>
    %17 = tpu.matmul %14, %16, %cst_21 {dimension_numbers = #tpu.dot_dimension_numbers<[1], [0], [0], [1], [0, 0, 1, 1], [], []>} : vector<16x128xf32>, vector<128x128xf32>, vector<16x128xf32> -> vector<16x128xf32>
    %18 = arith.addf %13, %17 : vector<16x128xf32>
    %c0_22 = arith.constant 0 : index
    %c0_23 = arith.constant 0 : index
    %19 = vector.load %arg3[%c0_22, %c0_23] : memref<1x128xf32, #tpu.memory_space<vmem>>, vector<1x128xf32>
    %20 = vector.broadcast %19 : vector<1x128xf32> to vector<16x128xf32>
    %21 = arith.addf %18, %20 : vector<16x128xf32>
    %cst_24 = arith.constant 0.000000e+00 : f32
    %22 = vector.broadcast %cst_24 : f32 to vector<16x128xf32>
    %23 = arith.maximumf %21, %22 : vector<16x128xf32>
    %c1_25 = arith.constant 1 : index
    %c0_26 = arith.constant 0 : index
    %24 = vector.load %arg13[%c1_25, %c0_26] : memref<18x128xf32, #tpu.memory_space<vmem>>, vector<16x128xf32>
    tpu.vector_store %arg13[%c1_25, %c0_26], %23 {strides = array<i32>} : memref<18x128xf32, #tpu.memory_space<vmem>>, vector<16x128xf32>,
    %c0_27 = arith.constant 0 : index
    %c0_28 = arith.constant 0 : index
    %25 = vector.load %arg13[%c0_27, %c0_28] : memref<18x128xf32, #tpu.memory_space<vmem>>, vector<16x128xf32>
    %c0_29 = arith.constant 0 : index
    %c0_30 = arith.constant 0 : index
    %c0_31 = arith.constant 0 : index
    %26 = vector.load %arg4[%c0_29, %c0_30, %c0_31] : memref<3x128x128xf32, #tpu.memory_space<vmem>>, vector<1x128x128xf32>
    %27 = vector.shape_cast %26 : vector<1x128x128xf32> to vector<128x128xf32>
    %cst_32 = arith.constant dense<0.000000e+00> : vector<16x128xf32>
    %28 = tpu.matmul %25, %27, %cst_32 {dimension_numbers = #tpu.dot_dimension_numbers<[1], [0], [0], [1], [0, 0, 1, 1], [], []>} : vector<16x128xf32>, vector<128x128xf32>, vector<16x128xf32> -> vector<16x128xf32>
    %c1_33 = arith.constant 1 : index
    %c0_34 = arith.constant 0 : index
    %29 = vector.load %arg13[%c1_33, %c0_34] : memref<18x128xf32, #tpu.memory_space<vmem>>, vector<16x128xf32>
    %c1_35 = arith.constant 1 : index
    %c0_36 = arith.constant 0 : index
    %c0_37 = arith.constant 0 : index
    %30 = vector.load %arg4[%c1_35, %c0_36, %c0_37] : memref<3x128x128xf32, #tpu.memory_space<vmem>>, vector<1x128x128xf32>
    %31 = vector.shape_cast %30 : vector<1x128x128xf32> to vector<128x128xf32>
    %cst_38 = arith.constant dense<0.000000e+00> : vector<16x128xf32>
    %32 = tpu.matmul %29, %31, %cst_38 {dimension_numbers = #tpu.dot_dimension_numbers<[1], [0], [0], [1], [0, 0, 1, 1], [], []>} : vector<16x128xf32>, vector<128x128xf32>, vector<16x128xf32> -> vector<16x128xf32>
    %33 = arith.addf %28, %32 : vector<16x128xf32>
    %c2_39 = arith.constant 2 : index
    %c0_40 = arith.constant 0 : index
    %34 = vector.load %arg13[%c2_39, %c0_40] : memref<18x128xf32, #tpu.memory_space<vmem>>, vector<16x128xf32>
    %c2_41 = arith.constant 2 : index
    %c0_42 = arith.constant 0 : index
    %c0_43 = arith.constant 0 : index
    %35 = vector.load %arg4[%c2_41, %c0_42, %c0_43] : memref<3x128x128xf32, #tpu.memory_space<vmem>>, vector<1x128x128xf32>
    %36 = vector.shape_cast %35 : vector<1x128x128xf32> to vector<128x128xf32>
    %cst_44 = arith.constant dense<0.000000e+00> : vector<16x128xf32>
    %37 = tpu.matmul %34, %36, %cst_44 {dimension_numbers = #tpu.dot_dimension_numbers<[1], [0], [0], [1], [0, 0, 1, 1], [], []>} : vector<16x128xf32>, vector<128x128xf32>, vector<16x128xf32> -> vector<16x128xf32>
    %38 = arith.addf %33, %37 : vector<16x128xf32>
    %c0_45 = arith.constant 0 : index
    %c0_46 = arith.constant 0 : index
    %39 = vector.load %arg5[%c0_45, %c0_46] : memref<1x128xf32, #tpu.memory_space<vmem>>, vector<1x128xf32>
    %40 = vector.broadcast %39 : vector<1x128xf32> to vector<16x128xf32>
    %41 = arith.addf %38, %40 : vector<16x128xf32>
    %cst_47 = arith.constant 0.000000e+00 : f32
    %42 = vector.broadcast %cst_47 : f32 to vector<16x128xf32>
    %43 = arith.maximumf %41, %42 : vector<16x128xf32>
    %c1_48 = arith.constant 1 : index
    %c0_49 = arith.constant 0 : index
    %44 = vector.load %arg13[%c1_48, %c0_49] : memref<18x128xf32, #tpu.memory_space<vmem>>, vector<16x128xf32>
    tpu.vector_store %arg13[%c1_48, %c0_49], %43 {strides = array<i32>} : memref<18x128xf32, #tpu.memory_space<vmem>>, vector<16x128xf32>,
    %c0_50 = arith.constant 0 : index
    %c0_51 = arith.constant 0 : index
    %45 = vector.load %arg13[%c0_50, %c0_51] : memref<18x128xf32, #tpu.memory_space<vmem>>, vector<16x128xf32>
    %c0_52 = arith.constant 0 : index
    %c0_53 = arith.constant 0 : index
    %c0_54 = arith.constant 0 : index
    %46 = vector.load %arg6[%c0_52, %c0_53, %c0_54] : memref<3x128x128xf32, #tpu.memory_space<vmem>>, vector<1x128x128xf32>
    %47 = vector.shape_cast %46 : vector<1x128x128xf32> to vector<128x128xf32>
    %cst_55 = arith.constant dense<0.000000e+00> : vector<16x128xf32>
    %48 = tpu.matmul %45, %47, %cst_55 {dimension_numbers = #tpu.dot_dimension_numbers<[1], [0], [0], [1], [0, 0, 1, 1], [], []>} : vector<16x128xf32>, vector<128x128xf32>, vector<16x128xf32> -> vector<16x128xf32>
    %c1_56 = arith.constant 1 : index
    %c0_57 = arith.constant 0 : index
    %49 = vector.load %arg13[%c1_56, %c0_57] : memref<18x128xf32, #tpu.memory_space<vmem>>, vector<16x128xf32>
    %c1_58 = arith.constant 1 : index
    %c0_59 = arith.constant 0 : index
    %c0_60 = arith.constant 0 : index
    %50 = vector.load %arg6[%c1_58, %c0_59, %c0_60] : memref<3x128x128xf32, #tpu.memory_space<vmem>>, vector<1x128x128xf32>
    %51 = vector.shape_cast %50 : vector<1x128x128xf32> to vector<128x128xf32>
    %cst_61 = arith.constant dense<0.000000e+00> : vector<16x128xf32>
    %52 = tpu.matmul %49, %51, %cst_61 {dimension_numbers = #tpu.dot_dimension_numbers<[1], [0], [0], [1], [0, 0, 1, 1], [], []>} : vector<16x128xf32>, vector<128x128xf32>, vector<16x128xf32> -> vector<16x128xf32>
    %53 = arith.addf %48, %52 : vector<16x128xf32>
    %c2_62 = arith.constant 2 : index
    %c0_63 = arith.constant 0 : index
    %54 = vector.load %arg13[%c2_62, %c0_63] : memref<18x128xf32, #tpu.memory_space<vmem>>, vector<16x128xf32>
    %c2_64 = arith.constant 2 : index
    %c0_65 = arith.constant 0 : index
    %c0_66 = arith.constant 0 : index
    %55 = vector.load %arg6[%c2_64, %c0_65, %c0_66] : memref<3x128x128xf32, #tpu.memory_space<vmem>>, vector<1x128x128xf32>
    %56 = vector.shape_cast %55 : vector<1x128x128xf32> to vector<128x128xf32>
    %cst_67 = arith.constant dense<0.000000e+00> : vector<16x128xf32>
    %57 = tpu.matmul %54, %56, %cst_67 {dimension_numbers = #tpu.dot_dimension_numbers<[1], [0], [0], [1], [0, 0, 1, 1], [], []>} : vector<16x128xf32>, vector<128x128xf32>, vector<16x128xf32> -> vector<16x128xf32>
    %58 = arith.addf %53, %57 : vector<16x128xf32>
    %c0_68 = arith.constant 0 : index
    %c0_69 = arith.constant 0 : index
    %59 = vector.load %arg7[%c0_68, %c0_69] : memref<1x128xf32, #tpu.memory_space<vmem>>, vector<1x128xf32>
    %60 = vector.broadcast %59 : vector<1x128xf32> to vector<16x128xf32>
    %61 = arith.addf %58, %60 : vector<16x128xf32>
    %cst_70 = arith.constant dense<0.000000e+00> : vector<128xf32>
    %62 = vector.multi_reduction <add>, %61, %cst_70 [0] : vector<16x128xf32> to vector<128xf32>
    %63 = vector.shape_cast %62 : vector<128xf32> to vector<1x128xf32>
    %c0_71 = arith.constant 0 : index
    %c0_72 = arith.constant 0 : index
    %64 = vector.load %arg10[%c0_71, %c0_72] : memref<128x4xf32, #tpu.memory_space<vmem>>, vector<128x4xf32>
    %cst_73 = arith.constant dense<0.000000e+00> : vector<1x4xf32>
    %65 = tpu.matmul %63, %64, %cst_73 {dimension_numbers = #tpu.dot_dimension_numbers<[1], [0], [0], [1], [0, 0, 1, 1], [], []>} : vector<1x128xf32>, vector<128x4xf32>, vector<1x4xf32> -> vector<1x4xf32>
    %cst_74 = arith.constant 5.120000e+02 : f32
    %66 = vector.broadcast %cst_74 : f32 to vector<1x4xf32>
    %67 = arith.divf %65, %66 : vector<1x4xf32>
    %c0_75 = arith.constant 0 : index
    %c0_76 = arith.constant 0 : index
    %68 = vector.load %arg11[%c0_75, %c0_76] : memref<4x128xf32, #tpu.memory_space<vmem>>, vector<4x128xf32>
    %cst_77 = arith.constant dense<0.000000e+00> : vector<1x128xf32>
    %69 = tpu.matmul %67, %68, %cst_77 {dimension_numbers = #tpu.dot_dimension_numbers<[1], [0], [0], [1], [0, 0, 1, 1], [], []>} : vector<1x4xf32>, vector<4x128xf32>, vector<1x128xf32> -> vector<1x128xf32>
    %70 = vector.broadcast %69 : vector<1x128xf32> to vector<16x128xf32>
    %71 = arith.subf %61, %70 : vector<16x128xf32>
    %72 = arith.mulf %71, %71 : vector<16x128xf32>
    %cst_78 = arith.constant dense<0.000000e+00> : vector<128xf32>
    %73 = vector.multi_reduction <add>, %72, %cst_78 [0] : vector<16x128xf32> to vector<128xf32>
    %74 = vector.shape_cast %73 : vector<128xf32> to vector<1x128xf32>
    %c0_79 = arith.constant 0 : index
    %c0_80 = arith.constant 0 : index
    %75 = vector.load %arg10[%c0_79, %c0_80] : memref<128x4xf32, #tpu.memory_space<vmem>>, vector<128x4xf32>
    %cst_81 = arith.constant dense<0.000000e+00> : vector<1x4xf32>
    %76 = tpu.matmul %74, %75, %cst_81 {dimension_numbers = #tpu.dot_dimension_numbers<[1], [0], [0], [1], [0, 0, 1, 1], [], []>} : vector<1x128xf32>, vector<128x4xf32>, vector<1x4xf32> -> vector<1x4xf32>
    %cst_82 = arith.constant 5.120000e+02 : f32
    %77 = vector.broadcast %cst_82 : f32 to vector<1x4xf32>
    %78 = arith.divf %76, %77 : vector<1x4xf32>
    %c0_83 = arith.constant 0 : index
    %c0_84 = arith.constant 0 : index
    %79 = vector.load %arg8[%c0_83, %c0_84] : memref<1x4xf32, #tpu.memory_space<vmem>>, vector<1x4xf32>
    %cst_85 = arith.constant 9.99999974E-6 : f32
    %80 = vector.broadcast %cst_85 : f32 to vector<1x4xf32>
    %81 = arith.addf %78, %80 : vector<1x4xf32>
    %82 = math.rsqrt %81 : vector<1x4xf32>
    %83 = arith.mulf %79, %82 : vector<1x4xf32>
    %c0_86 = arith.constant 0 : index
    %c0_87 = arith.constant 0 : index
    %84 = vector.load %arg9[%c0_86, %c0_87] : memref<1x4xf32, #tpu.memory_space<vmem>>, vector<1x4xf32>
    %85 = tpu.concatenate %83, %84 in 0 : vector<1x4xf32>, vector<1x4xf32> -> vector<2x4xf32>
    %c0_88 = arith.constant 0 : index
    %c0_89 = arith.constant 0 : index
    %86 = vector.load %arg11[%c0_88, %c0_89] : memref<4x128xf32, #tpu.memory_space<vmem>>, vector<4x128xf32>
    %cst_90 = arith.constant dense<0.000000e+00> : vector<2x128xf32>
    %87 = tpu.matmul %85, %86, %cst_90 {dimension_numbers = #tpu.dot_dimension_numbers<[1], [0], [0], [1], [0, 0, 1, 1], [], []>} : vector<2x4xf32>, vector<4x128xf32>, vector<2x128xf32> -> vector<2x128xf32>
    %88 = vector.extract_strided_slice %87 {offsets = [0, 0], sizes = [1, 128], strides = [1, 1]} : vector<2x128xf32> to vector<1x128xf32>
    %89 = vector.broadcast %88 : vector<1x128xf32> to vector<16x128xf32>
    %90 = arith.mulf %71, %89 : vector<16x128xf32>
    %91 = vector.extract_strided_slice %87 {offsets = [1, 0], sizes = [1, 128], strides = [1, 1]} : vector<2x128xf32> to vector<1x128xf32>
    %92 = vector.broadcast %91 : vector<1x128xf32> to vector<16x128xf32>
    %93 = arith.addf %90, %92 : vector<16x128xf32>
    %94 = arith.addf %93, %3 : vector<16x128xf32>
    %cst_91 = arith.constant 0.000000e+00 : f32
    %95 = vector.broadcast %cst_91 : f32 to vector<16x128xf32>
    %96 = arith.maximumf %94, %95 : vector<16x128xf32>
    %c0_92 = arith.constant 0 : index
    %c0_93 = arith.constant 0 : index
    %97 = vector.load %arg12[%c0_92, %c0_93] : memref<16x128xf32, #tpu.memory_space<vmem>>, vector<16x128xf32>
    tpu.vector_store %arg12[%c0_92, %c0_93], %96 {strides = array<i32>} : memref<16x128xf32, #tpu.memory_space<vmem>>, vector<16x128xf32>,
    return
  }
  func.func @transform_0(%arg0: i32) -> (i32, i32) {
    %c0_i32 = arith.constant 0 : i32
    %c0_i32_0 = arith.constant 0 : i32
    %c0_i32_1 = arith.constant 0 : i32
    return %c0_i32, %c0_i32_0 : i32, i32
  }
  func.func @transform_1(%arg0: i32) -> (i32, i32, i32) {
    %c0_i32 = arith.constant 0 : i32
    %c0_i32_0 = arith.constant 0 : i32
    %c0_i32_1 = arith.constant 0 : i32
    %c0_i32_2 = arith.constant 0 : i32
    return %c0_i32, %c0_i32_0, %c0_i32_1 : i32, i32, i32
  }
  func.func @transform_2(%arg0: i32) -> (i32, i32) {
    %c0_i32 = arith.constant 0 : i32
    %c0_i32_0 = arith.constant 0 : i32
    %c0_i32_1 = arith.constant 0 : i32
    return %c0_i32, %c0_i32_0 : i32, i32
  }
  func.func @transform_3(%arg0: i32) -> (i32, i32, i32) {
    %c0_i32 = arith.constant 0 : i32
    %c0_i32_0 = arith.constant 0 : i32
    %c0_i32_1 = arith.constant 0 : i32
    %c0_i32_2 = arith.constant 0 : i32
    return %c0_i32, %c0_i32_0, %c0_i32_1 : i32, i32, i32
  }
  func.func @transform_4(%arg0: i32) -> (i32, i32) {
    %c0_i32 = arith.constant 0 : i32
    %c0_i32_0 = arith.constant 0 : i32
    %c0_i32_1 = arith.constant 0 : i32
    return %c0_i32, %c0_i32_0 : i32, i32
  }
  func.func @transform_5(%arg0: i32) -> (i32, i32, i32) {
    %c0_i32 = arith.constant 0 : i32
    %c0_i32_0 = arith.constant 0 : i32
    %c0_i32_1 = arith.constant 0 : i32
    %c0_i32_2 = arith.constant 0 : i32
    return %c0_i32, %c0_i32_0, %c0_i32_1 : i32, i32, i32
  }
  func.func @transform_6(%arg0: i32) -> (i32, i32) {
    %c0_i32 = arith.constant 0 : i32
    %c0_i32_0 = arith.constant 0 : i32
    %c0_i32_1 = arith.constant 0 : i32
    return %c0_i32, %c0_i32_0 : i32, i32
  }
  func.func @transform_7(%arg0: i32) -> (i32, i32) {
    %c0_i32 = arith.constant 0 : i32
    %c0_i32_0 = arith.constant 0 : i32
    %c0_i32_1 = arith.constant 0 : i32
    return %c0_i32, %c0_i32_0 : i32, i32
  }
  func.func @transform_8(%arg0: i32) -> (i32, i32) {
    %c0_i32 = arith.constant 0 : i32
    %c0_i32_0 = arith.constant 0 : i32
    %c0_i32_1 = arith.constant 0 : i32
    return %c0_i32, %c0_i32_0 : i32, i32
  }
  func.func @transform_9(%arg0: i32) -> (i32, i32) {
    %c0_i32 = arith.constant 0 : i32
    %c0_i32_0 = arith.constant 0 : i32
    %c0_i32_1 = arith.constant 0 : i32
    return %c0_i32, %c0_i32_0 : i32, i32
  }
  func.func @transform_10(%arg0: i32) -> (i32, i32) {
    %c0_i32 = arith.constant 0 : i32
    %c0_i32_0 = arith.constant 0 : i32
    %c0_i32_1 = arith.constant 0 : i32
    return %c0_i32, %c0_i32_0 : i32, i32
  }
  func.func @transform_11(%arg0: i32) -> (i32, i32) {
    %c0_i32 = arith.constant 0 : i32
    %c0_i32_0 = arith.constant 0 : i32
    %c0_i32_1 = arith.constant 0 : i32
    return %c0_i32, %c0_i32_0 : i32, i32
  }
}

</mosaic_0001>

<llo_original>
// kernel: tpu_custom_call.1
$region0: #{tpu_custom_call.1}
  #allocation0 [shape = 'u32[]', space=smem, size = 0x4, offset = 0x4, fixed_abs, tag = 'smem constant byte address 0x4 - core index']
  #allocation1 [shape = 'u32[144,128]{1,0:T(1,128)}', space=vmem, size = 0x12000, scoped, tag = 'internal scratch']
  #allocation2 [shape = 'f32[18,128]{1,0:T(8,128)}', space=vmem, size = 0x3000, scoped, tag = 'scratch operand']
  %s0 = inlined_call_operand.vmem [shape: f32[16,128], index: 0, kind: input, shape index: {}]
  %s1 = inlined_call_operand.hbm [shape: f32[3,128,128], index: 1, kind: input, shape index: {}]
  %s2 = inlined_call_operand.vmem [shape: f32[1,128], index: 2, kind: input, shape index: {}]
  %s3 = inlined_call_operand.hbm [shape: f32[3,128,128], index: 3, kind: input, shape index: {}]
  %s4 = inlined_call_operand.vmem [shape: f32[1,128], index: 4, kind: input, shape index: {}]
  %s5 = inlined_call_operand.hbm [shape: f32[3,128,128], index: 5, kind: input, shape index: {}]
  %s6 = inlined_call_operand.vmem [shape: f32[1,128], index: 6, kind: input, shape index: {}]
  %s7 = inlined_call_operand.vmem [shape: f32[1,4], index: 7, kind: input, shape index: {}]
  %s8 = inlined_call_operand.vmem [shape: f32[1,4], index: 8, kind: input, shape index: {}]
  %s9 = inlined_call_operand.vmem [shape: f32[128,4], index: 9, kind: input, shape index: {}]
  %s10 = inlined_call_operand.vmem [shape: f32[4,128], index: 10, kind: input, shape index: {}]
  %s11 = inlined_call_operand.hbm [shape: f32[16,128], index: 11, kind: output, shape index: {}]
  %s12 = sld [smem:[#allocation0]]
  $region66: #{tpu_custom_call.1} parent=0
    _
  %s14 = ssub.s32 1, %s12
  %s15 = scalar_select 0, %s14, %s12
  $region1: #{tpu_custom_call.1} parent=0
    #allocation3 [shape = 'u8[196608]{0}', space=vmem, size = 0x30000, scoped, tag = 'input window, operand 1, single buffered']
    #allocation4 [shape = 's32[1]{0}', space=sflag, size = 0x4, scoped, tag = 'scoped memory for tpu_custom_call.1']
    #allocation5 [shape = 's32[1]{0}', space=sflag, size = 0x4, scoped, tag = 'scoped memory for tpu_custom_call.1']
    #allocation6 [shape = 'u8[196608]{0}', space=vmem, size = 0x30000, scoped, tag = 'input window, operand 3, single buffered']
    #allocation7 [shape = 's32[1]{0}', space=sflag, size = 0x4, scoped, tag = 'scoped memory for tpu_custom_call.1']
    #allocation8 [shape = 'u8[196608]{0}', space=vmem, size = 0x30000, scoped, tag = 'input window, operand 5, single buffered']
    #allocation9 [shape = 'u8[8192]{0}', space=vmem, size = 0x2000, scoped, tag = 'output window, operand 0, single buffered']
    %16 = vsyncpa [#allocation4], 0
    %17 = vsyncpa [#allocation7], 0
    %18 = vsyncpa [#allocation5], 0
    // Predicated region
    $region2: #{tpu_custom_call.1} parent=1 // pred_check
      _
    $region3: #{tpu_custom_call.1} parent=1 // pred_check_branch
      %20 = sbr.rel (0) target = $region5
    $region4: #{tpu_custom_call.1} parent=1 // pred_region
      _
    $region5: #{tpu_custom_call.1} parent=1 // pred_fallthru
      _
    // Predicated region
    $region6: #{tpu_custom_call.1} parent=1 // pred_check
      _
    $region7: #{tpu_custom_call.1} parent=1 // pred_check_branch
      %22 = sbr.rel (0) target = $region9
    $region8: #{tpu_custom_call.1} parent=1 // pred_region
      %s24 = ssub.s32 6144, 6144
      %25 = vsyncadd [#allocation4], %s24
      %s26 = sshll.u32 [#allocation3], 4
      %s27 = int_to_ptr.vmem [resolvable:$true] %s26
      %32 = dma.hbm_to_vmem [thread:$0]  %s1, 6144, %s27, [#allocation4], 128, 128, 8
    $region9: #{tpu_custom_call.1} parent=1 // pred_fallthru
      _
    // Predicated region
    $region10: #{tpu_custom_call.1} parent=1 // pred_check
      _
    $region11: #{tpu_custom_call.1} parent=1 // pred_check_branch
      %34 = sbr.rel (0) target = $region13
    $region12: #{tpu_custom_call.1} parent=1 // pred_region
      _
    $region13: #{tpu_custom_call.1} parent=1 // pred_fallthru
      _
    // Predicated region
    $region14: #{tpu_custom_call.1} parent=1 // pred_check
      _
    $region15: #{tpu_custom_call.1} parent=1 // pred_check_branch
      %36 = sbr.rel (0) target = $region17
    $region16: #{tpu_custom_call.1} parent=1 // pred_region
      %s38 = ssub.s32 6144, 6144
      %39 = vsyncadd [#allocation7], %s38
      %s40 = sshll.u32 [#allocation6], 4
      %s41 = int_to_ptr.vmem [resolvable:$true] %s40
      %46 = dma.hbm_to_vmem [thread:$0]  %s3, 6144, %s41, [#allocation7], 128, 128, 8
    $region17: #{tpu_custom_call.1} parent=1 // pred_fallthru
      _
    // Predicated region
    $region18: #{tpu_custom_call.1} parent=1 // pred_check
      _
    $region19: #{tpu_custom_call.1} parent=1 // pred_check_branch
      %48 = sbr.rel (0) target = $region21
    $region20: #{tpu_custom_call.1} parent=1 // pred_region
      _
    $region21: #{tpu_custom_call.1} parent=1 // pred_fallthru
      _
    // Predicated region
    $region22: #{tpu_custom_call.1} parent=1 // pred_check
      _
    $region23: #{tpu_custom_call.1} parent=1 // pred_check_branch
      %50 = sbr.rel (0) target = $region25
    $region24: #{tpu_custom_call.1} parent=1 // pred_region
      %s52 = ssub.s32 6144, 6144
      %53 = vsyncadd [#allocation7], %s52
      %s54 = sshll.u32 [#allocation8], 4
      %s55 = int_to_ptr.vmem [resolvable:$true] %s54
      %60 = dma.hbm_to_vmem [thread:$0]  %s5, 6144, %s55, [#allocation7], 128, 128, 8
    $region25: #{tpu_custom_call.1} parent=1 // pred_fallthru
      _
    // Predicated region
    $region26: #{tpu_custom_call.1} parent=1 // pred_check
      _
    $region27: #{tpu_custom_call.1} parent=1 // pred_check_branch
      %62 = sbr.rel (0) target = $region29
    $region28: #{tpu_custom_call.1} parent=1 // pred_region
      _
    $region29: #{tpu_custom_call.1} parent=1 // pred_fallthru
      _
    // Predicated region
    $region30: #{tpu_custom_call.1} parent=1 // pred_check
      _
    $region31: #{tpu_custom_call.1} parent=1 // pred_check_branch
      %64 = sbr.rel (0) target = $region33
    $region32: #{tpu_custom_call.1} parent=1 // pred_region
      _
    $region33: #{tpu_custom_call.1} parent=1 // pred_fallthru
      _
    // Predicated region
    $region34: #{tpu_custom_call.1} parent=1 // pred_check
      _
    $region35: #{tpu_custom_call.1} parent=1 // pred_check_branch
      %66 = sbr.rel (0) target = $region37
    $region36: #{tpu_custom_call.1} parent=1 // pred_region
      _
    $region37: #{tpu_custom_call.1} parent=1 // pred_fallthru
      _
    // Predicated region
    $region38: #{tpu_custom_call.1} parent=1 // pred_check
      _
    $region39: #{tpu_custom_call.1} parent=1 // pred_check_branch
      %68 = sbr.rel (0) target = $region41
    $region40: #{tpu_custom_call.1} parent=1 // pred_region
      _
    $region41: #{tpu_custom_call.1} parent=1 // pred_fallthru
      _
    // Predicated region
    $region42: #{tpu_custom_call.1} parent=1 // pred_check
      _
    $region43: #{tpu_custom_call.1} parent=1 // pred_check_branch
      %70 = sbr.rel (0) target = $region45
    $region44: #{tpu_custom_call.1} parent=1 // pred_region
      _
    $region45: #{tpu_custom_call.1} parent=1 // pred_fallthru
      _
    // Predicated region
    $region46: #{tpu_custom_call.1} parent=1 // pred_check
      _
    $region47: #{tpu_custom_call.1} parent=1 // pred_check_branch
      %72 = sbr.rel (0) target = $region49
    $region48: #{tpu_custom_call.1} parent=1 // pred_region
      %73 = dma.done [#allocation4], 6144
    $region49: #{tpu_custom_call.1} parent=1 // pred_fallthru
      _
    // Predicated region
    $region50: #{tpu_custom_call.1} parent=1 // pred_check
      _
    $region51: #{tpu_custom_call.1} parent=1 // pred_check_branch
      %75 = sbr.rel (0) target = $region53
    $region52: #{tpu_custom_call.1} parent=1 // pred_region
      %76 = dma.done [#allocation7], 6144
    $region53: #{tpu_custom_call.1} parent=1 // pred_fallthru
      _
    // Predicated region
    $region54: #{tpu_custom_call.1} parent=1 // pred_check
      _
    $region55: #{tpu_custom_call.1} parent=1 // pred_check_branch
      %78 = sbr.rel (0) target = $region57
    $region56: #{tpu_custom_call.1} parent=1 // pred_region
      %79 = dma.done [#allocation7], 6144
    $region57: #{tpu_custom_call.1} parent=1 // pred_fallthru
      _
    %80 = vst [vmem:[#allocation2] sm:$0x1] 0.0
    %81 = vst [vmem:[#allocation2 + $0x11] sm:$0x1] 0.0
    %v82 = vld [vmem:[%s0] sm:$0xff]
    %v83 = vld [vmem:[%s0 + $0x8] sm:$0xff]
    %84 = vst [vmem:[#allocation2 + $0x1] sm:$0xff] %v82
    %85 = vst [vmem:[#allocation2 + $0x9] sm:$0xff] %v83
    %v86 = vld [vmem:[#allocation2] sm:$0xff]
    %v87 = vld [vmem:[#allocation2 + $0x8] sm:$0xff]
    %v88 = vld [vmem:[#allocation3] sm:$0xff]
    %v89 = vld [vmem:[#allocation3 + $0x8] sm:$0xff]
    %v90 = vld [vmem:[#allocation3 + $0x10] sm:$0xff]
    %v91 = vld [vmem:[#allocation3 + $0x18] sm:$0xff]
    %v92 = vld [vmem:[#allocation3 + $0x20] sm:$0xff]
    %v93 = vld [vmem:[#allocation3 + $0x28] sm:$0xff]
    %v94 = vld [vmem:[#allocation3 + $0x30] sm:$0xff]
    %v95 = vld [vmem:[#allocation3 + $0x38] sm:$0xff]
    %v96 = vld [vmem:[#allocation3 + $0x40] sm:$0xff]
    %v97 = vld [vmem:[#allocation3 + $0x48] sm:$0xff]
    %v98 = vld [vmem:[#allocation3 + $0x50] sm:$0xff]
    %v99 = vld [vmem:[#allocation3 + $0x58] sm:$0xff]
    %v100 = vld [vmem:[#allocation3 + $0x60] sm:$0xff]
    %v101 = vld [vmem:[#allocation3 + $0x68] sm:$0xff]
    %v102 = vld [vmem:[#allocation3 + $0x70] sm:$0xff]
    %v103 = vld [vmem:[#allocation3 + $0x78] sm:$0xff]
    %v104 = vld [vmem:[#allocation2 + $0x1] sm:$0xff]
    %v105 = vld [vmem:[#allocation2 + $0x9] sm:$0xff]
    %s106 = scalar_lea.vmem [#allocation3], 128
    %v107 = vld [vmem:[%s106] sm:$0xff]
    %v108 = vld [vmem:[%s106 + $0x8] sm:$0xff]
    %v109 = vld [vmem:[%s106 + $0x10] sm:$0xff]
    %v110 = vld [vmem:[%s106 + $0x18] sm:$0xff]
    %v111 = vld [vmem:[%s106 + $0x20] sm:$0xff]
    %v112 = vld [vmem:[%s106 + $0x28] sm:$0xff]
    %v113 = vld [vmem:[%s106 + $0x30] sm:$0xff]
    %v114 = vld [vmem:[%s106 + $0x38] sm:$0xff]
    %v115 = vld [vmem:[%s106 + $0x40] sm:$0xff]
    %v116 = vld [vmem:[%s106 + $0x48] sm:$0xff]
    %v117 = vld [vmem:[%s106 + $0x50] sm:$0xff]
    %v118 = vld [vmem:[%s106 + $0x58] sm:$0xff]
    %v119 = vld [vmem:[%s106 + $0x60] sm:$0xff]
    %v120 = vld [vmem:[%s106 + $0x68] sm:$0xff]
    %v121 = vld [vmem:[%s106 + $0x70] sm:$0xff]
    %v122 = vld [vmem:[%s106 + $0x78] sm:$0xff]
    %123 = vmatprep.subr.mxu0 0.0
    %124 = vmatpush1.msra.mxu0 %v107
    %125 = vmatprep.subr.mxu0 0.0
    %126 = vmatpush1.msra.mxu0 %v108
    %127 = vmatprep.subr.mxu0 0.0
    %128 = vmatpush1.msra.mxu0 %v109
    %129 = vmatprep.subr.mxu0 0.0
    %130 = vmatpush1.msra.mxu0 %v110
    %131 = vmatprep.subr.mxu0 0.0
    %132 = vmatpush1.msra.mxu0 %v111
    %133 = vmatprep.subr.mxu0 0.0
    %134 = vmatpush1.msra.mxu0 %v112
    %135 = vmatprep.subr.mxu0 0.0
    %136 = vmatpush1.msra.mxu0 %v113
    %137 = vmatprep.subr.mxu0 0.0
    %138 = vmatpush1.msra.mxu0 %v114
    %139 = vmatprep.subr.mxu0 0.0
    %140 = vmatpush1.msra.mxu0 %v115
    %141 = vmatprep.subr.mxu0 0.0
    %142 = vmatpush1.msra.mxu0 %v116
    %143 = vmatprep.subr.mxu0 0.0
    %144 = vmatpush1.msra.mxu0 %v117
    %145 = vmatprep.subr.mxu0 0.0
    %146 = vmatpush1.msra.mxu0 %v118
    %147 = vmatprep.subr.mxu0 0.0
    %148 = vmatpush1.msra.mxu0 %v119
    %149 = vmatprep.subr.mxu0 0.0
    %150 = vmatpush1.msra.mxu0 %v120
    %151 = vmatprep.subr.mxu0 0.0
    %152 = vmatpush1.msra.mxu0 %v121
    %153 = vmatprep.subr.mxu0 0.0
    %154 = vmatpush1.msra.mxu0 %v122
    %155 = vmatprep.subr.mxu0 0.0
    %156 = vmatpush1.msra.mxu0 0.0
    %157 = vmatprep.subr.mxu0 0.0
    %158 = vmatpush1.msra.mxu0 0.0
    %159 = vmatprep.subr.mxu0 0.0
    %160 = vmatpush1.msra.mxu0 0.0
    %161 = vmatprep.subr.mxu0 0.0
    %162 = vmatpush1.msra.mxu0 0.0
    %163 = vmatprep.subr.mxu0 0.0
    %164 = vmatpush1.msra.mxu0 0.0
    %165 = vmatprep.subr.mxu0 0.0
    %166 = vmatpush1.msra.mxu0 0.0
    %167 = vmatprep.subr.mxu0 0.0
    %168 = vmatpush1.msra.mxu0 0.0
    %169 = vmatprep.subr.mxu0 0.0
    %170 = vmatpush1.msra.mxu0 0.0
    %171 = vmatprep.subr.mxu0 0.0
    %172 = vmatpush1.msra.mxu0 0.0
    %173 = vmatprep.subr.mxu0 0.0
    %174 = vmatpush1.msra.mxu0 0.0
    %175 = vmatprep.subr.mxu0 0.0
    %176 = vmatpush1.msra.mxu0 0.0
    %177 = vmatprep.subr.mxu0 0.0
    %178 = vmatpush1.msra.mxu0 0.0
    %179 = vmatprep.subr.mxu0 0.0
    %180 = vmatpush1.msra.mxu0 0.0
    %181 = vmatprep.subr.mxu0 0.0
    %182 = vmatpush1.msra.mxu0 0.0
    %183 = vmatprep.subr.mxu0 0.0
    %184 = vmatpush1.msra.mxu0 0.0
    %185 = vmatprep.subr.mxu0 0.0
    %186 = vmatpush1.msra.mxu0 0.0
    %187 = vmatprep.mubr.f32.mxu0 0.0
    %188 = vmatmul.mubr.f32.gmra.mrb[0].mxu0 %v104
    %v189 = vpop.f32.mrb[0].mxu0
    %v190 = vadd.f32 0.0, %v189
    %v191 = vpop.f32.mrb[0].mxu0
    %192 = vmatprep.mubr.f32.mxu0 0.0
    %193 = vmatmul.mubr.f32.gmra.mrb[0].mxu0 %v105
    %v194 = vpop.f32.mrb[0].mxu0
    %v195 = vadd.f32 0.0, %v194
    %v196 = vpop.f32.mrb[0].mxu0
    %197 = vdwg.mxu0
    %198 = vmatprep.subr.mxu0 0.0
    %199 = vmatpush1.msra.mxu0 %v88
    %200 = vmatprep.subr.mxu0 0.0
    %201 = vmatpush1.msra.mxu0 %v89
    %202 = vmatprep.subr.mxu0 0.0
    %203 = vmatpush1.msra.mxu0 %v90
    %204 = vmatprep.subr.mxu0 0.0
    %205 = vmatpush1.msra.mxu0 %v91
    %206 = vmatprep.subr.mxu0 0.0
    %207 = vmatpush1.msra.mxu0 %v92
    %208 = vmatprep.subr.mxu0 0.0
    %209 = vmatpush1.msra.mxu0 %v93
    %210 = vmatprep.subr.mxu0 0.0
    %211 = vmatpush1.msra.mxu0 %v94
    %212 = vmatprep.subr.mxu0 0.0
    %213 = vmatpush1.msra.mxu0 %v95
    %214 = vmatprep.subr.mxu0 0.0
    %215 = vmatpush1.msra.mxu0 %v96
    %216 = vmatprep.subr.mxu0 0.0
    %217 = vmatpush1.msra.mxu0 %v97
    %218 = vmatprep.subr.mxu0 0.0
    %219 = vmatpush1.msra.mxu0 %v98
    %220 = vmatprep.subr.mxu0 0.0
    %221 = vmatpush1.msra.mxu0 %v99
    %222 = vmatprep.subr.mxu0 0.0
    %223 = vmatpush1.msra.mxu0 %v100
    %224 = vmatprep.subr.mxu0 0.0
    %225 = vmatpush1.msra.mxu0 %v101
    %226 = vmatprep.subr.mxu0 0.0
    %227 = vmatpush1.msra.mxu0 %v102
    %228 = vmatprep.subr.mxu0 0.0
    %229 = vmatpush1.msra.mxu0 %v103
    %230 = vmatprep.subr.mxu0 0.0
    %231 = vmatpush1.msra.mxu0 0.0
    %232 = vmatprep.subr.mxu0 0.0
    %233 = vmatpush1.msra.mxu0 0.0
    %234 = vmatprep.subr.mxu0 0.0
    %235 = vmatpush1.msra.mxu0 0.0
    %236 = vmatprep.subr.mxu0 0.0
    %237 = vmatpush1.msra.mxu0 0.0
    %238 = vmatprep.subr.mxu0 0.0
    %239 = vmatpush1.msra.mxu0 0.0
    %240 = vmatprep.subr.mxu0 0.0
    %241 = vmatpush1.msra.mxu0 0.0
    %242 = vmatprep.subr.mxu0 0.0
    %243 = vmatpush1.msra.mxu0 0.0
    %244 = vmatprep.subr.mxu0 0.0
    %245 = vmatpush1.msra.mxu0 0.0
    %246 = vmatprep.subr.mxu0 0.0
    %247 = vmatpush1.msra.mxu0 0.0
    %248 = vmatprep.subr.mxu0 0.0
    %249 = vmatpush1.msra.mxu0 0.0
    %250 = vmatprep.subr.mxu0 0.0
    %251 = vmatpush1.msra.mxu0 0.0
    %252 = vmatprep.subr.mxu0 0.0
    %253 = vmatpush1.msra.mxu0 0.0
    %254 = vmatprep.subr.mxu0 0.0
    %255 = vmatpush1.msra.mxu0 0.0
    %256 = vmatprep.subr.mxu0 0.0
    %257 = vmatpush1.msra.mxu0 0.0
    %258 = vmatprep.subr.mxu0 0.0
    %259 = vmatpush1.msra.mxu0 0.0
    %260 = vmatprep.subr.mxu0 0.0
    %261 = vmatpush1.msra.mxu0 0.0
    %262 = vmatprep.mubr.f32.mxu0 0.0
    %263 = vmatmul.mubr.f32.gmra.mrb[0].mxu0 %v86
    %v264 = vpop.f32.mrb[0].mxu0
    %v265 = vadd.f32 %v190, %v264
    %v266 = vpop.f32.mrb[0].mxu0
    %267 = vmatprep.mubr.f32.mxu0 0.0
    %268 = vmatmul.mubr.f32.gmra.mrb[0].mxu0 %v87
    %v269 = vpop.f32.mrb[0].mxu0
    %v270 = vadd.f32 %v195, %v269
    %v271 = vpop.f32.mrb[0].mxu0
    %272 = vdwg.mxu0
    %v273 = vld [vmem:[#allocation2 + $0x2] sm:$0xff]
    %v274 = vld [vmem:[#allocation2 + $0xa] sm:$0xff]
    %s275 = scalar_lea.vmem [#allocation3], 256
    %v276 = vld [vmem:[%s275] sm:$0xff]
    %v277 = vld [vmem:[%s275 + $0x8] sm:$0xff]
    %v278 = vld [vmem:[%s275 + $0x10] sm:$0xff]
    %v279 = vld [vmem:[%s275 + $0x18] sm:$0xff]
    %v280 = vld [vmem:[%s275 + $0x20] sm:$0xff]
    %v281 = vld [vmem:[%s275 + $0x28] sm:$0xff]
    %v282 = vld [vmem:[%s275 + $0x30] sm:$0xff]
    %v283 = vld [vmem:[%s275 + $0x38] sm:$0xff]
    %v284 = vld [vmem:[%s275 + $0x40] sm:$0xff]
    %v285 = vld [vmem:[%s275 + $0x48] sm:$0xff]
    %v286 = vld [vmem:[%s275 + $0x50] sm:$0xff]
    %v287 = vld [vmem:[%s275 + $0x58] sm:$0xff]
    %v288 = vld [vmem:[%s275 + $0x60] sm:$0xff]
    %v289 = vld [vmem:[%s275 + $0x68] sm:$0xff]
    %v290 = vld [vmem:[%s275 + $0x70] sm:$0xff]
    %v291 = vld [vmem:[%s275 + $0x78] sm:$0xff]
    %292 = vmatprep.subr.mxu0 0.0
    %293 = vmatpush1.msra.mxu0 %v276
    %294 = vmatprep.subr.mxu0 0.0
    %295 = vmatpush1.msra.mxu0 %v277
    %296 = vmatprep.subr.mxu0 0.0
    %297 = vmatpush1.msra.mxu0 %v278
    %298 = vmatprep.subr.mxu0 0.0
    %299 = vmatpush1.msra.mxu0 %v279
    %300 = vmatprep.subr.mxu0 0.0
    %301 = vmatpush1.msra.mxu0 %v280
    %302 = vmatprep.subr.mxu0 0.0
    %303 = vmatpush1.msra.mxu0 %v281
    %304 = vmatprep.subr.mxu0 0.0
    %305 = vmatpush1.msra.mxu0 %v282
    %306 = vmatprep.subr.mxu0 0.0
    %307 = vmatpush1.msra.mxu0 %v283
    %308 = vmatprep.subr.mxu0 0.0
    %309 = vmatpush1.msra.mxu0 %v284
    %310 = vmatprep.subr.mxu0 0.0
    %311 = vmatpush1.msra.mxu0 %v285
    %312 = vmatprep.subr.mxu0 0.0
    %313 = vmatpush1.msra.mxu0 %v286
    %314 = vmatprep.subr.mxu0 0.0
    %315 = vmatpush1.msra.mxu0 %v287
    %316 = vmatprep.subr.mxu0 0.0
    %317 = vmatpush1.msra.mxu0 %v288
    %318 = vmatprep.subr.mxu0 0.0
    %319 = vmatpush1.msra.mxu0 %v289
    %320 = vmatprep.subr.mxu0 0.0
    %321 = vmatpush1.msra.mxu0 %v290
    %322 = vmatprep.subr.mxu0 0.0
    %323 = vmatpush1.msra.mxu0 %v291
    %324 = vmatprep.subr.mxu0 0.0
    %325 = vmatpush1.msra.mxu0 0.0
    %326 = vmatprep.subr.mxu0 0.0
    %327 = vmatpush1.msra.mxu0 0.0
    %328 = vmatprep.subr.mxu0 0.0
    %329 = vmatpush1.msra.mxu0 0.0
    %330 = vmatprep.subr.mxu0 0.0
    %331 = vmatpush1.msra.mxu0 0.0
    %332 = vmatprep.subr.mxu0 0.0
    %333 = vmatpush1.msra.mxu0 0.0
    %334 = vmatprep.subr.mxu0 0.0
    %335 = vmatpush1.msra.mxu0 0.0
    %336 = vmatprep.subr.mxu0 0.0
    %337 = vmatpush1.msra.mxu0 0.0
    %338 = vmatprep.subr.mxu0 0.0
    %339 = vmatpush1.msra.mxu0 0.0
    %340 = vmatprep.subr.mxu0 0.0
    %341 = vmatpush1.msra.mxu0 0.0
    %342 = vmatprep.subr.mxu0 0.0
    %343 = vmatpush1.msra.mxu0 0.0
    %344 = vmatprep.subr.mxu0 0.0
    %345 = vmatpush1.msra.mxu0 0.0
    %346 = vmatprep.subr.mxu0 0.0
    %347 = vmatpush1.msra.mxu0 0.0
    %348 = vmatprep.subr.mxu0 0.0
    %349 = vmatpush1.msra.mxu0 0.0
    %350 = vmatprep.subr.mxu0 0.0
    %351 = vmatpush1.msra.mxu0 0.0
    %352 = vmatprep.subr.mxu0 0.0
    %353 = vmatpush1.msra.mxu0 0.0
    %354 = vmatprep.subr.mxu0 0.0
    %355 = vmatpush1.msra.mxu0 0.0
    %356 = vmatprep.mubr.f32.mxu0 0.0
    %357 = vmatmul.mubr.f32.gmra.mrb[0].mxu0 %v273
    %v358 = vpop.f32.mrb[0].mxu0
    %v359 = vadd.f32 0.0, %v358
    %v360 = vpop.f32.mrb[0].mxu0
    %361 = vmatprep.mubr.f32.mxu0 0.0
    %362 = vmatmul.mubr.f32.gmra.mrb[0].mxu0 %v274
    %v363 = vpop.f32.mrb[0].mxu0
    %v364 = vadd.f32 0.0, %v363
    %v365 = vpop.f32.mrb[0].mxu0
    %366 = vdwg.mxu0
    %v367 = vadd.f32 %v265, %v359
    %v368 = vadd.f32 %v270, %v364
    %v369 = vld [vmem:[%s2] sm:$0x1]
    %v371 = vlaneseq
    %v372 = vshrl.u32 %v371, 7
    %v373 = vsub.s32 0, %v372
    %v374 = vrot.slane %v369, %v373
    %v376 = vadd.f32 %v367, %v374
    %v377 = vadd.f32 %v368, %v374
    %v378 = vmax.f32 %v376, 0.0
    %v379 = vmax.f32 %v377, 0.0
    %380 = vst [vmem:[#allocation2 + $0x1] sm:$0xff] %v378
    %381 = vst [vmem:[#allocation2 + $0x9] sm:$0xff] %v379
    %v382 = vld [vmem:[#allocation2] sm:$0xff]
    %v383 = vld [vmem:[#allocation2 + $0x8] sm:$0xff]
    %v384 = vld [vmem:[#allocation6] sm:$0xff]
    %v385 = vld [vmem:[#allocation6 + $0x8] sm:$0xff]
    %v386 = vld [vmem:[#allocation6 + $0x10] sm:$0xff]
    %v387 = vld [vmem:[#allocation6 + $0x18] sm:$0xff]
    %v388 = vld [vmem:[#allocation6 + $0x20] sm:$0xff]
    %v389 = vld [vmem:[#allocation6 + $0x28] sm:$0xff]
    %v390 = vld [vmem:[#allocation6 + $0x30] sm:$0xff]
    %v391 = vld [vmem:[#allocation6 + $0x38] sm:$0xff]
    %v392 = vld [vmem:[#allocation6 + $0x40] sm:$0xff]
    %v393 = vld [vmem:[#allocation6 + $0x48] sm:$0xff]
    %v394 = vld [vmem:[#allocation6 + $0x50] sm:$0xff]
    %v395 = vld [vmem:[#allocation6 + $0x58] sm:$0xff]
    %v396 = vld [vmem:[#allocation6 + $0x60] sm:$0xff]
    %v397 = vld [vmem:[#allocation6 + $0x68] sm:$0xff]
    %v398 = vld [vmem:[#allocation6 + $0x70] sm:$0xff]
    %v399 = vld [vmem:[#allocation6 + $0x78] sm:$0xff]
    %v400 = vld [vmem:[#allocation2 + $0x1] sm:$0xff]
    %v401 = vld [vmem:[#allocation2 + $0x9] sm:$0xff]
    %s402 = scalar_lea.vmem [#allocation6], 128
    %v403 = vld [vmem:[%s402] sm:$0xff]
    %v404 = vld [vmem:[%s402 + $0x8] sm:$0xff]
    %v405 = vld [vmem:[%s402 + $0x10] sm:$0xff]
    %v406 = vld [vmem:[%s402 + $0x18] sm:$0xff]
    %v407 = vld [vmem:[%s402 + $0x20] sm:$0xff]
    %v408 = vld [vmem:[%s402 + $0x28] sm:$0xff]
    %v409 = vld [vmem:[%s402 + $0x30] sm:$0xff]
    %v410 = vld [vmem:[%s402 + $0x38] sm:$0xff]
    %v411 = vld [vmem:[%s402 + $0x40] sm:$0xff]
    %v412 = vld [vmem:[%s402 + $0x48] sm:$0xff]
    %v413 = vld [vmem:[%s402 + $0x50] sm:$0xff]
    %v414 = vld [vmem:[%s402 + $0x58] sm:$0xff]
    %v415 = vld [vmem:[%s402 + $0x60] sm:$0xff]
    %v416 = vld [vmem:[%s402 + $0x68] sm:$0xff]
    %v417 = vld [vmem:[%s402 + $0x70] sm:$0xff]
    %v418 = vld [vmem:[%s402 + $0x78] sm:$0xff]
    %419 = vmatprep.subr.mxu0 0.0
    %420 = vmatpush1.msra.mxu0 %v403
    %421 = vmatprep.subr.mxu0 0.0
    %422 = vmatpush1.msra.mxu0 %v404
    %423 = vmatprep.subr.mxu0 0.0
    %424 = vmatpush1.msra.mxu0 %v405
    %425 = vmatprep.subr.mxu0 0.0
    %426 = vmatpush1.msra.mxu0 %v406
    %427 = vmatprep.subr.mxu0 0.0
    %428 = vmatpush1.msra.mxu0 %v407
    %429 = vmatprep.subr.mxu0 0.0
    %430 = vmatpush1.msra.mxu0 %v408
    %431 = vmatprep.subr.mxu0 0.0
    %432 = vmatpush1.msra.mxu0 %v409
    %433 = vmatprep.subr.mxu0 0.0
    %434 = vmatpush1.msra.mxu0 %v410
    %435 = vmatprep.subr.mxu0 0.0
    %436 = vmatpush1.msra.mxu0 %v411
    %437 = vmatprep.subr.mxu0 0.0
    %438 = vmatpush1.msra.mxu0 %v412
    %439 = vmatprep.subr.mxu0 0.0
    %440 = vmatpush1.msra.mxu0 %v413
    %441 = vmatprep.subr.mxu0 0.0
    %442 = vmatpush1.msra.mxu0 %v414
    %443 = vmatprep.subr.mxu0 0.0
    %444 = vmatpush1.msra.mxu0 %v415
    %445 = vmatprep.subr.mxu0 0.0
    %446 = vmatpush1.msra.mxu0 %v416
    %447 = vmatprep.subr.mxu0 0.0
    %448 = vmatpush1.msra.mxu0 %v417
    %449 = vmatprep.subr.mxu0 0.0
    %450 = vmatpush1.msra.mxu0 %v418
    %451 = vmatprep.subr.mxu0 0.0
    %452 = vmatpush1.msra.mxu0 0.0
    %453 = vmatprep.subr.mxu0 0.0
    %454 = vmatpush1.msra.mxu0 0.0
    %455 = vmatprep.subr.mxu0 0.0
    %456 = vmatpush1.msra.mxu0 0.0
    %457 = vmatprep.subr.mxu0 0.0
    %458 = vmatpush1.msra.mxu0 0.0
    %459 = vmatprep.subr.mxu0 0.0
    %460 = vmatpush1.msra.mxu0 0.0
    %461 = vmatprep.subr.mxu0 0.0
    %462 = vmatpush1.msra.mxu0 0.0
    %463 = vmatprep.subr.mxu0 0.0
    %464 = vmatpush1.msra.mxu0 0.0
    %465 = vmatprep.subr.mxu0 0.0
    %466 = vmatpush1.msra.mxu0 0.0
    %467 = vmatprep.subr.mxu0 0.0
    %468 = vmatpush1.msra.mxu0 0.0
    %469 = vmatprep.subr.mxu0 0.0
    %470 = vmatpush1.msra.mxu0 0.0
    %471 = vmatprep.subr.mxu0 0.0
    %472 = vmatpush1.msra.mxu0 0.0
    %473 = vmatprep.subr.mxu0 0.0
    %474 = vmatpush1.msra.mxu0 0.0
    %475 = vmatprep.subr.mxu0 0.0
    %476 = vmatpush1.msra.mxu0 0.0
    %477 = vmatprep.subr.mxu0 0.0
    %478 = vmatpush1.msra.mxu0 0.0
    %479 = vmatprep.subr.mxu0 0.0
    %480 = vmatpush1.msra.mxu0 0.0
    %481 = vmatprep.subr.mxu0 0.0
    %482 = vmatpush1.msra.mxu0 0.0
    %483 = vmatprep.mubr.f32.mxu0 0.0
    %484 = vmatmul.mubr.f32.gmra.mrb[0].mxu0 %v400
    %v485 = vpop.f32.mrb[0].mxu0
    %v486 = vadd.f32 0.0, %v485
    %v487 = vpop.f32.mrb[0].mxu0
    %488 = vmatprep.mubr.f32.mxu0 0.0
    %489 = vmatmul.mubr.f32.gmra.mrb[0].mxu0 %v401
    %v490 = vpop.f32.mrb[0].mxu0
    %v491 = vadd.f32 0.0, %v490
    %v492 = vpop.f32.mrb[0].mxu0
    %493 = vdwg.mxu0
    %494 = vmatprep.subr.mxu0 0.0
    %495 = vmatpush1.msra.mxu0 %v384
    %496 = vmatprep.subr.mxu0 0.0
    %497 = vmatpush1.msra.mxu0 %v385
    %498 = vmatprep.subr.mxu0 0.0
    %499 = vmatpush1.msra.mxu0 %v386
    %500 = vmatprep.subr.mxu0 0.0
    %501 = vmatpush1.msra.mxu0 %v387
    %502 = vmatprep.subr.mxu0 0.0
    %503 = vmatpush1.msra.mxu0 %v388
    %504 = vmatprep.subr.mxu0 0.0
    %505 = vmatpush1.msra.mxu0 %v389
    %506 = vmatprep.subr.mxu0 0.0
    %507 = vmatpush1.msra.mxu0 %v390
    %508 = vmatprep.subr.mxu0 0.0
    %509 = vmatpush1.msra.mxu0 %v391
    %510 = vmatprep.subr.mxu0 0.0
    %511 = vmatpush1.msra.mxu0 %v392
    %512 = vmatprep.subr.mxu0 0.0
    %513 = vmatpush1.msra.mxu0 %v393
    %514 = vmatprep.subr.mxu0 0.0
    %515 = vmatpush1.msra.mxu0 %v394
    %516 = vmatprep.subr.mxu0 0.0
    %517 = vmatpush1.msra.mxu0 %v395
    %518 = vmatprep.subr.mxu0 0.0
    %519 = vmatpush1.msra.mxu0 %v396
    %520 = vmatprep.subr.mxu0 0.0
    %521 = vmatpush1.msra.mxu0 %v397
    %522 = vmatprep.subr.mxu0 0.0
    %523 = vmatpush1.msra.mxu0 %v398
    %524 = vmatprep.subr.mxu0 0.0
    %525 = vmatpush1.msra.mxu0 %v399
    %526 = vmatprep.subr.mxu0 0.0
    %527 = vmatpush1.msra.mxu0 0.0
    %528 = vmatprep.subr.mxu0 0.0
    %529 = vmatpush1.msra.mxu0 0.0
    %530 = vmatprep.subr.mxu0 0.0
    %531 = vmatpush1.msra.mxu0 0.0
    %532 = vmatprep.subr.mxu0 0.0
    %533 = vmatpush1.msra.mxu0 0.0
    %534 = vmatprep.subr.mxu0 0.0
    %535 = vmatpush1.msra.mxu0 0.0
    %536 = vmatprep.subr.mxu0 0.0
    %537 = vmatpush1.msra.mxu0 0.0
    %538 = vmatprep.subr.mxu0 0.0
    %539 = vmatpush1.msra.mxu0 0.0
    %540 = vmatprep.subr.mxu0 0.0
    %541 = vmatpush1.msra.mxu0 0.0
    %542 = vmatprep.subr.mxu0 0.0
    %543 = vmatpush1.msra.mxu0 0.0
    %544 = vmatprep.subr.mxu0 0.0
    %545 = vmatpush1.msra.mxu0 0.0
    %546 = vmatprep.subr.mxu0 0.0
    %547 = vmatpush1.msra.mxu0 0.0
    %548 = vmatprep.subr.mxu0 0.0
    %549 = vmatpush1.msra.mxu0 0.0
    %550 = vmatprep.subr.mxu0 0.0
    %551 = vmatpush1.msra.mxu0 0.0
    %552 = vmatprep.subr.mxu0 0.0
    %553 = vmatpush1.msra.mxu0 0.0
    %554 = vmatprep.subr.mxu0 0.0
    %555 = vmatpush1.msra.mxu0 0.0
    %556 = vmatprep.subr.mxu0 0.0
    %557 = vmatpush1.msra.mxu0 0.0
    %558 = vmatprep.mubr.f32.mxu0 0.0
    %559 = vmatmul.mubr.f32.gmra.mrb[0].mxu0 %v382
    %v560 = vpop.f32.mrb[0].mxu0
    %v561 = vadd.f32 %v486, %v560
    %v562 = vpop.f32.mrb[0].mxu0
    %563 = vmatprep.mubr.f32.mxu0 0.0
    %564 = vmatmul.mubr.f32.gmra.mrb[0].mxu0 %v383
    %v565 = vpop.f32.mrb[0].mxu0
    %v566 = vadd.f32 %v491, %v565
    %v567 = vpop.f32.mrb[0].mxu0
    %568 = vdwg.mxu0
    %v569 = vld [vmem:[#allocation2 + $0x2] sm:$0xff]
    %v570 = vld [vmem:[#allocation2 + $0xa] sm:$0xff]
    %s571 = scalar_lea.vmem [#allocation6], 256
    %v572 = vld [vmem:[%s571] sm:$0xff]
    %v573 = vld [vmem:[%s571 + $0x8] sm:$0xff]
    %v574 = vld [vmem:[%s571 + $0x10] sm:$0xff]
    %v575 = vld [vmem:[%s571 + $0x18] sm:$0xff]
    %v576 = vld [vmem:[%s571 + $0x20] sm:$0xff]
    %v577 = vld [vmem:[%s571 + $0x28] sm:$0xff]
    %v578 = vld [vmem:[%s571 + $0x30] sm:$0xff]
    %v579 = vld [vmem:[%s571 + $0x38] sm:$0xff]
    %v580 = vld [vmem:[%s571 + $0x40] sm:$0xff]
    %v581 = vld [vmem:[%s571 + $0x48] sm:$0xff]
    %v582 = vld [vmem:[%s571 + $0x50] sm:$0xff]
    %v583 = vld [vmem:[%s571 + $0x58] sm:$0xff]
    %v584 = vld [vmem:[%s571 + $0x60] sm:$0xff]
    %v585 = vld [vmem:[%s571 + $0x68] sm:$0xff]
    %v586 = vld [vmem:[%s571 + $0x70] sm:$0xff]
    %v587 = vld [vmem:[%s571 + $0x78] sm:$0xff]
    %588 = vmatprep.subr.mxu0 0.0
    %589 = vmatpush1.msra.mxu0 %v572
    %590 = vmatprep.subr.mxu0 0.0
    %591 = vmatpush1.msra.mxu0 %v573
    %592 = vmatprep.subr.mxu0 0.0
    %593 = vmatpush1.msra.mxu0 %v574
    %594 = vmatprep.subr.mxu0 0.0
    %595 = vmatpush1.msra.mxu0 %v575
    %596 = vmatprep.subr.mxu0 0.0
    %597 = vmatpush1.msra.mxu0 %v576
    %598 = vmatprep.subr.mxu0 0.0
    %599 = vmatpush1.msra.mxu0 %v577
    %600 = vmatprep.subr.mxu0 0.0
    %601 = vmatpush1.msra.mxu0 %v578
    %602 = vmatprep.subr.mxu0 0.0
    %603 = vmatpush1.msra.mxu0 %v579
    %604 = vmatprep.subr.mxu0 0.0
    %605 = vmatpush1.msra.mxu0 %v580
    %606 = vmatprep.subr.mxu0 0.0
    %607 = vmatpush1.msra.mxu0 %v581
    %608 = vmatprep.subr.mxu0 0.0
    %609 = vmatpush1.msra.mxu0 %v582
    %610 = vmatprep.subr.mxu0 0.0
    %611 = vmatpush1.msra.mxu0 %v583
    %612 = vmatprep.subr.mxu0 0.0
    %613 = vmatpush1.msra.mxu0 %v584
    %614 = vmatprep.subr.mxu0 0.0
    %615 = vmatpush1.msra.mxu0 %v585
    %616 = vmatprep.subr.mxu0 0.0
    %617 = vmatpush1.msra.mxu0 %v586
    %618 = vmatprep.subr.mxu0 0.0
    %619 = vmatpush1.msra.mxu0 %v587
    %620 = vmatprep.subr.mxu0 0.0
    %621 = vmatpush1.msra.mxu0 0.0
    %622 = vmatprep.subr.mxu0 0.0
    %623 = vmatpush1.msra.mxu0 0.0
    %624 = vmatprep.subr.mxu0 0.0
    %625 = vmatpush1.msra.mxu0 0.0
    %626 = vmatprep.subr.mxu0 0.0
    %627 = vmatpush1.msra.mxu0 0.0
    %628 = vmatprep.subr.mxu0 0.0
    %629 = vmatpush1.msra.mxu0 0.0
    %630 = vmatprep.subr.mxu0 0.0
    %631 = vmatpush1.msra.mxu0 0.0
    %632 = vmatprep.subr.mxu0 0.0
    %633 = vmatpush1.msra.mxu0 0.0
    %634 = vmatprep.subr.mxu0 0.0
    %635 = vmatpush1.msra.mxu0 0.0
    %636 = vmatprep.subr.mxu0 0.0
    %637 = vmatpush1.msra.mxu0 0.0
    %638 = vmatprep.subr.mxu0 0.0
    %639 = vmatpush1.msra.mxu0 0.0
    %640 = vmatprep.subr.mxu0 0.0
    %641 = vmatpush1.msra.mxu0 0.0
    %642 = vmatprep.subr.mxu0 0.0
    %643 = vmatpush1.msra.mxu0 0.0
    %644 = vmatprep.subr.mxu0 0.0
    %645 = vmatpush1.msra.mxu0 0.0
    %646 = vmatprep.subr.mxu0 0.0
    %647 = vmatpush1.msra.mxu0 0.0
    %648 = vmatprep.subr.mxu0 0.0
    %649 = vmatpush1.msra.mxu0 0.0
    %650 = vmatprep.subr.mxu0 0.0
    %651 = vmatpush1.msra.mxu0 0.0
    %652 = vmatprep.mubr.f32.mxu0 0.0
    %653 = vmatmul.mubr.f32.gmra.mrb[0].mxu0 %v569
    %v654 = vpop.f32.mrb[0].mxu0
    %v655 = vadd.f32 0.0, %v654
    %v656 = vpop.f32.mrb[0].mxu0
    %657 = vmatprep.mubr.f32.mxu0 0.0
    %658 = vmatmul.mubr.f32.gmra.mrb[0].mxu0 %v570
    %v659 = vpop.f32.mrb[0].mxu0
    %v660 = vadd.f32 0.0, %v659
    %v661 = vpop.f32.mrb[0].mxu0
    %662 = vdwg.mxu0
    %v663 = vadd.f32 %v561, %v655
    %v664 = vadd.f32 %v566, %v660
    %v665 = vld [vmem:[%s4] sm:$0x1]
    %v667 = vlaneseq
    %v668 = vshrl.u32 %v667, 7
    %v669 = vsub.s32 0, %v668
    %v670 = vrot.slane %v665, %v669
    %v672 = vadd.f32 %v663, %v670
    %v673 = vadd.f32 %v664, %v670
    %v674 = vmax.f32 %v672, 0.0
    %v675 = vmax.f32 %v673, 0.0
    %676 = vst [vmem:[#allocation2 + $0x1] sm:$0xff] %v674
    %677 = vst [vmem:[#allocation2 + $0x9] sm:$0xff] %v675
    %v678 = vld [vmem:[#allocation2] sm:$0xff]
    %v679 = vld [vmem:[#allocation2 + $0x8] sm:$0xff]
    %v680 = vld [vmem:[#allocation8] sm:$0xff]
    %v681 = vld [vmem:[#allocation8 + $0x8] sm:$0xff]
    %v682 = vld [vmem:[#allocation8 + $0x10] sm:$0xff]
    %v683 = vld [vmem:[#allocation8 + $0x18] sm:$0xff]
    %v684 = vld [vmem:[#allocation8 + $0x20] sm:$0xff]
    %v685 = vld [vmem:[#allocation8 + $0x28] sm:$0xff]
    %v686 = vld [vmem:[#allocation8 + $0x30] sm:$0xff]
    %v687 = vld [vmem:[#allocation8 + $0x38] sm:$0xff]
    %v688 = vld [vmem:[#allocation8 + $0x40] sm:$0xff]
    %v689 = vld [vmem:[#allocation8 + $0x48] sm:$0xff]
    %v690 = vld [vmem:[#allocation8 + $0x50] sm:$0xff]
    %v691 = vld [vmem:[#allocation8 + $0x58] sm:$0xff]
    %v692 = vld [vmem:[#allocation8 + $0x60] sm:$0xff]
    %v693 = vld [vmem:[#allocation8 + $0x68] sm:$0xff]
    %v694 = vld [vmem:[#allocation8 + $0x70] sm:$0xff]
    %v695 = vld [vmem:[#allocation8 + $0x78] sm:$0xff]
    %v696 = vld [vmem:[#allocation2 + $0x1] sm:$0xff]
    %v697 = vld [vmem:[#allocation2 + $0x9] sm:$0xff]
    %s698 = scalar_lea.vmem [#allocation8], 128
    %v699 = vld [vmem:[%s698] sm:$0xff]
    %v700 = vld [vmem:[%s698 + $0x8] sm:$0xff]
    %v701 = vld [vmem:[%s698 + $0x10] sm:$0xff]
    %v702 = vld [vmem:[%s698 + $0x18] sm:$0xff]
    %v703 = vld [vmem:[%s698 + $0x20] sm:$0xff]
    %v704 = vld [vmem:[%s698 + $0x28] sm:$0xff]
    %v705 = vld [vmem:[%s698 + $0x30] sm:$0xff]
    %v706 = vld [vmem:[%s698 + $0x38] sm:$0xff]
    %v707 = vld [vmem:[%s698 + $0x40] sm:$0xff]
    %v708 = vld [vmem:[%s698 + $0x48] sm:$0xff]
    %v709 = vld [vmem:[%s698 + $0x50] sm:$0xff]
    %v710 = vld [vmem:[%s698 + $0x58] sm:$0xff]
    %v711 = vld [vmem:[%s698 + $0x60] sm:$0xff]
    %v712 = vld [vmem:[%s698 + $0x68] sm:$0xff]
    %v713 = vld [vmem:[%s698 + $0x70] sm:$0xff]
    %v714 = vld [vmem:[%s698 + $0x78] sm:$0xff]
    %715 = vmatprep.subr.mxu0 0.0
    %716 = vmatpush1.msra.mxu0 %v699
    %717 = vmatprep.subr.mxu0 0.0
    %718 = vmatpush1.msra.mxu0 %v700
    %719 = vmatprep.subr.mxu0 0.0
    %720 = vmatpush1.msra.mxu0 %v701
    %721 = vmatprep.subr.mxu0 0.0
    %722 = vmatpush1.msra.mxu0 %v702
    %723 = vmatprep.subr.mxu0 0.0
    %724 = vmatpush1.msra.mxu0 %v703
    %725 = vmatprep.subr.mxu0 0.0
    %726 = vmatpush1.msra.mxu0 %v704
    %727 = vmatprep.subr.mxu0 0.0
    %728 = vmatpush1.msra.mxu0 %v705
    %729 = vmatprep.subr.mxu0 0.0
    %730 = vmatpush1.msra.mxu0 %v706
    %731 = vmatprep.subr.mxu0 0.0
    %732 = vmatpush1.msra.mxu0 %v707
    %733 = vmatprep.subr.mxu0 0.0
    %734 = vmatpush1.msra.mxu0 %v708
    %735 = vmatprep.subr.mxu0 0.0
    %736 = vmatpush1.msra.mxu0 %v709
    %737 = vmatprep.subr.mxu0 0.0
    %738 = vmatpush1.msra.mxu0 %v710
    %739 = vmatprep.subr.mxu0 0.0
    %740 = vmatpush1.msra.mxu0 %v711
    %741 = vmatprep.subr.mxu0 0.0
    %742 = vmatpush1.msra.mxu0 %v712
    %743 = vmatprep.subr.mxu0 0.0
    %744 = vmatpush1.msra.mxu0 %v713
    %745 = vmatprep.subr.mxu0 0.0
    %746 = vmatpush1.msra.mxu0 %v714
    %747 = vmatprep.subr.mxu0 0.0
    %748 = vmatpush1.msra.mxu0 0.0
    %749 = vmatprep.subr.mxu0 0.0
    %750 = vmatpush1.msra.mxu0 0.0
    %751 = vmatprep.subr.mxu0 0.0
    %752 = vmatpush1.msra.mxu0 0.0
    %753 = vmatprep.subr.mxu0 0.0
    %754 = vmatpush1.msra.mxu0 0.0
    %755 = vmatprep.subr.mxu0 0.0
    %756 = vmatpush1.msra.mxu0 0.0
    %757 = vmatprep.subr.mxu0 0.0
    %758 = vmatpush1.msra.mxu0 0.0
    %759 = vmatprep.subr.mxu0 0.0
    %760 = vmatpush1.msra.mxu0 0.0
    %761 = vmatprep.subr.mxu0 0.0
    %762 = vmatpush1.msra.mxu0 0.0
    %763 = vmatprep.subr.mxu0 0.0
    %764 = vmatpush1.msra.mxu0 0.0
    %765 = vmatprep.subr.mxu0 0.0
    %766 = vmatpush1.msra.mxu0 0.0
    %767 = vmatprep.subr.mxu0 0.0
    %768 = vmatpush1.msra.mxu0 0.0
    %769 = vmatprep.subr.mxu0 0.0
    %770 = vmatpush1.msra.mxu0 0.0
    %771 = vmatprep.subr.mxu0 0.0
    %772 = vmatpush1.msra.mxu0 0.0
    %773 = vmatprep.subr.mxu0 0.0
    %774 = vmatpush1.msra.mxu0 0.0
    %775 = vmatprep.subr.mxu0 0.0
    %776 = vmatpush1.msra.mxu0 0.0
    %777 = vmatprep.subr.mxu0 0.0
    %778 = vmatpush1.msra.mxu0 0.0
    %779 = vmatprep.mubr.f32.mxu0 0.0
    %780 = vmatmul.mubr.f32.gmra.mrb[0].mxu0 %v696
    %v781 = vpop.f32.mrb[0].mxu0
    %v782 = vadd.f32 0.0, %v781
    %v783 = vpop.f32.mrb[0].mxu0
    %784 = vmatprep.mubr.f32.mxu0 0.0
    %785 = vmatmul.mubr.f32.gmra.mrb[0].mxu0 %v697
    %v786 = vpop.f32.mrb[0].mxu0
    %v787 = vadd.f32 0.0, %v786
    %v788 = vpop.f32.mrb[0].mxu0
    %789 = vdwg.mxu0
    %790 = vmatprep.subr.mxu0 0.0
    %791 = vmatpush1.msra.mxu0 %v680
    %792 = vmatprep.subr.mxu0 0.0
    %793 = vmatpush1.msra.mxu0 %v681
    %794 = vmatprep.subr.mxu0 0.0
    %795 = vmatpush1.msra.mxu0 %v682
    %796 = vmatprep.subr.mxu0 0.0
    %797 = vmatpush1.msra.mxu0 %v683
    %798 = vmatprep.subr.mxu0 0.0
    %799 = vmatpush1.msra.mxu0 %v684
    %800 = vmatprep.subr.mxu0 0.0
    %801 = vmatpush1.msra.mxu0 %v685
    %802 = vmatprep.subr.mxu0 0.0
    %803 = vmatpush1.msra.mxu0 %v686
    %804 = vmatprep.subr.mxu0 0.0
    %805 = vmatpush1.msra.mxu0 %v687
    %806 = vmatprep.subr.mxu0 0.0
    %807 = vmatpush1.msra.mxu0 %v688
    %808 = vmatprep.subr.mxu0 0.0
    %809 = vmatpush1.msra.mxu0 %v689
    %810 = vmatprep.subr.mxu0 0.0
    %811 = vmatpush1.msra.mxu0 %v690
    %812 = vmatprep.subr.mxu0 0.0
    %813 = vmatpush1.msra.mxu0 %v691
    %814 = vmatprep.subr.mxu0 0.0
    %815 = vmatpush1.msra.mxu0 %v692
    %816 = vmatprep.subr.mxu0 0.0
    %817 = vmatpush1.msra.mxu0 %v693
    %818 = vmatprep.subr.mxu0 0.0
    %819 = vmatpush1.msra.mxu0 %v694
    %820 = vmatprep.subr.mxu0 0.0
    %821 = vmatpush1.msra.mxu0 %v695
    %822 = vmatprep.subr.mxu0 0.0
    %823 = vmatpush1.msra.mxu0 0.0
    %824 = vmatprep.subr.mxu0 0.0
    %825 = vmatpush1.msra.mxu0 0.0
    %826 = vmatprep.subr.mxu0 0.0
    %827 = vmatpush1.msra.mxu0 0.0
    %828 = vmatprep.subr.mxu0 0.0
    %829 = vmatpush1.msra.mxu0 0.0
    %830 = vmatprep.subr.mxu0 0.0
    %831 = vmatpush1.msra.mxu0 0.0
    %832 = vmatprep.subr.mxu0 0.0
    %833 = vmatpush1.msra.mxu0 0.0
    %834 = vmatprep.subr.mxu0 0.0
    %835 = vmatpush1.msra.mxu0 0.0
    %836 = vmatprep.subr.mxu0 0.0
    %837 = vmatpush1.msra.mxu0 0.0
    %838 = vmatprep.subr.mxu0 0.0
    %839 = vmatpush1.msra.mxu0 0.0
    %840 = vmatprep.subr.mxu0 0.0
    %841 = vmatpush1.msra.mxu0 0.0
    %842 = vmatprep.subr.mxu0 0.0
    %843 = vmatpush1.msra.mxu0 0.0
    %844 = vmatprep.subr.mxu0 0.0
    %845 = vmatpush1.msra.mxu0 0.0
    %846 = vmatprep.subr.mxu0 0.0
    %847 = vmatpush1.msra.mxu0 0.0
    %848 = vmatprep.subr.mxu0 0.0
    %849 = vmatpush1.msra.mxu0 0.0
    %850 = vmatprep.subr.mxu0 0.0
    %851 = vmatpush1.msra.mxu0 0.0
    %852 = vmatprep.subr.mxu0 0.0
    %853 = vmatpush1.msra.mxu0 0.0
    %854 = vmatprep.mubr.f32.mxu0 0.0
    %855 = vmatmul.mubr.f32.gmra.mrb[0].mxu0 %v678
    %v856 = vpop.f32.mrb[0].mxu0
    %v857 = vadd.f32 %v782, %v856
    %v858 = vpop.f32.mrb[0].mxu0
    %859 = vmatprep.mubr.f32.mxu0 0.0
    %860 = vmatmul.mubr.f32.gmra.mrb[0].mxu0 %v679
    %v861 = vpop.f32.mrb[0].mxu0
    %v862 = vadd.f32 %v787, %v861
    %v863 = vpop.f32.mrb[0].mxu0
    %864 = vdwg.mxu0
    %v865 = vld [vmem:[#allocation2 + $0x2] sm:$0xff]
    %v866 = vld [vmem:[#allocation2 + $0xa] sm:$0xff]
    %s867 = scalar_lea.vmem [#allocation8], 256
    %v868 = vld [vmem:[%s867] sm:$0xff]
    %v869 = vld [vmem:[%s867 + $0x8] sm:$0xff]
    %v870 = vld [vmem:[%s867 + $0x10] sm:$0xff]
    %v871 = vld [vmem:[%s867 + $0x18] sm:$0xff]
    %v872 = vld [vmem:[%s867 + $0x20] sm:$0xff]
    %v873 = vld [vmem:[%s867 + $0x28] sm:$0xff]
    %v874 = vld [vmem:[%s867 + $0x30] sm:$0xff]
    %v875 = vld [vmem:[%s867 + $0x38] sm:$0xff]
    %v876 = vld [vmem:[%s867 + $0x40] sm:$0xff]
    %v877 = vld [vmem:[%s867 + $0x48] sm:$0xff]
    %v878 = vld [vmem:[%s867 + $0x50] sm:$0xff]
    %v879 = vld [vmem:[%s867 + $0x58] sm:$0xff]
    %v880 = vld [vmem:[%s867 + $0x60] sm:$0xff]
    %v881 = vld [vmem:[%s867 + $0x68] sm:$0xff]
    %v882 = vld [vmem:[%s867 + $0x70] sm:$0xff]
    %v883 = vld [vmem:[%s867 + $0x78] sm:$0xff]
    %884 = vmatprep.subr.mxu0 0.0
    %885 = vmatpush1.msra.mxu0 %v868
    %886 = vmatprep.subr.mxu0 0.0
    %887 = vmatpush1.msra.mxu0 %v869
    %888 = vmatprep.subr.mxu0 0.0
    %889 = vmatpush1.msra.mxu0 %v870
    %890 = vmatprep.subr.mxu0 0.0
    %891 = vmatpush1.msra.mxu0 %v871
    %892 = vmatprep.subr.mxu0 0.0
    %893 = vmatpush1.msra.mxu0 %v872
    %894 = vmatprep.subr.mxu0 0.0
    %895 = vmatpush1.msra.mxu0 %v873
    %896 = vmatprep.subr.mxu0 0.0
    %897 = vmatpush1.msra.mxu0 %v874
    %898 = vmatprep.subr.mxu0 0.0
    %899 = vmatpush1.msra.mxu0 %v875
    %900 = vmatprep.subr.mxu0 0.0
    %901 = vmatpush1.msra.mxu0 %v876
    %902 = vmatprep.subr.mxu0 0.0
    %903 = vmatpush1.msra.mxu0 %v877
    %904 = vmatprep.subr.mxu0 0.0
    %905 = vmatpush1.msra.mxu0 %v878
    %906 = vmatprep.subr.mxu0 0.0
    %907 = vmatpush1.msra.mxu0 %v879
    %908 = vmatprep.subr.mxu0 0.0
    %909 = vmatpush1.msra.mxu0 %v880
    %910 = vmatprep.subr.mxu0 0.0
    %911 = vmatpush1.msra.mxu0 %v881
    %912 = vmatprep.subr.mxu0 0.0
    %913 = vmatpush1.msra.mxu0 %v882
    %914 = vmatprep.subr.mxu0 0.0
    %915 = vmatpush1.msra.mxu0 %v883
    %916 = vmatprep.subr.mxu0 0.0
    %917 = vmatpush1.msra.mxu0 0.0
    %918 = vmatprep.subr.mxu0 0.0
    %919 = vmatpush1.msra.mxu0 0.0
    %920 = vmatprep.subr.mxu0 0.0
    %921 = vmatpush1.msra.mxu0 0.0
    %922 = vmatprep.subr.mxu0 0.0
    %923 = vmatpush1.msra.mxu0 0.0
    %924 = vmatprep.subr.mxu0 0.0
    %925 = vmatpush1.msra.mxu0 0.0
    %926 = vmatprep.subr.mxu0 0.0
    %927 = vmatpush1.msra.mxu0 0.0
    %928 = vmatprep.subr.mxu0 0.0
    %929 = vmatpush1.msra.mxu0 0.0
    %930 = vmatprep.subr.mxu0 0.0
    %931 = vmatpush1.msra.mxu0 0.0
    %932 = vmatprep.subr.mxu0 0.0
    %933 = vmatpush1.msra.mxu0 0.0
    %934 = vmatprep.subr.mxu0 0.0
    %935 = vmatpush1.msra.mxu0 0.0
    %936 = vmatprep.subr.mxu0 0.0
    %937 = vmatpush1.msra.mxu0 0.0
    %938 = vmatprep.subr.mxu0 0.0
    %939 = vmatpush1.msra.mxu0 0.0
    %940 = vmatprep.subr.mxu0 0.0
    %941 = vmatpush1.msra.mxu0 0.0
    %942 = vmatprep.subr.mxu0 0.0
    %943 = vmatpush1.msra.mxu0 0.0
    %944 = vmatprep.subr.mxu0 0.0
    %945 = vmatpush1.msra.mxu0 0.0
    %946 = vmatprep.subr.mxu0 0.0
    %947 = vmatpush1.msra.mxu0 0.0
    %948 = vmatprep.mubr.f32.mxu0 0.0
    %949 = vmatmul.mubr.f32.gmra.mrb[0].mxu0 %v865
    %v950 = vpop.f32.mrb[0].mxu0
    %v951 = vadd.f32 0.0, %v950
    %v952 = vpop.f32.mrb[0].mxu0
    %953 = vmatprep.mubr.f32.mxu0 0.0
    %954 = vmatmul.mubr.f32.gmra.mrb[0].mxu0 %v866
    %v955 = vpop.f32.mrb[0].mxu0
    %v956 = vadd.f32 0.0, %v955
    %v957 = vpop.f32.mrb[0].mxu0
    %958 = vdwg.mxu0
    %v959 = vadd.f32 %v857, %v951
    %v960 = vadd.f32 %v862, %v956
    %v961 = vld [vmem:[%s6] sm:$0x1]
    %v963 = vlaneseq
    %v964 = vshrl.u32 %v963, 7
    %v965 = vsub.s32 0, %v964
    %v966 = vrot.slane %v961, %v965
    %v968 = vadd.f32 %v959, %v966
    %v969 = vadd.f32 %v960, %v966
    %v970 = vadd.f32 %v968, %v969
    %v971 = vrot.slane %v970, 4
    %v972 = vadd.f32 %v970, %v971
    %v973 = vrot.slane %v972, 2
    %v974 = vadd.f32 %v972, %v973
    %v975 = vrot.slane %v974, 1
    %v976 = vadd.f32 %v974, %v975
    %v977 = vld [vmem:[%s9] sm:$0xff]
    %v978 = vld [vmem:[%s9 + $0x8] sm:$0xff]
    %v979 = vld [vmem:[%s9 + $0x10] sm:$0xff]
    %v980 = vld [vmem:[%s9 + $0x18] sm:$0xff]
    %v981 = vld [vmem:[%s9 + $0x20] sm:$0xff]
    %v982 = vld [vmem:[%s9 + $0x28] sm:$0xff]
    %v983 = vld [vmem:[%s9 + $0x30] sm:$0xff]
    %v984 = vld [vmem:[%s9 + $0x38] sm:$0xff]
    %v985 = vld [vmem:[%s9 + $0x40] sm:$0xff]
    %v986 = vld [vmem:[%s9 + $0x48] sm:$0xff]
    %v987 = vld [vmem:[%s9 + $0x50] sm:$0xff]
    %v988 = vld [vmem:[%s9 + $0x58] sm:$0xff]
    %v989 = vld [vmem:[%s9 + $0x60] sm:$0xff]
    %v990 = vld [vmem:[%s9 + $0x68] sm:$0xff]
    %v991 = vld [vmem:[%s9 + $0x70] sm:$0xff]
    %v992 = vld [vmem:[%s9 + $0x78] sm:$0xff]
    %993 = vmatprep.subr.mxu0 0.0
    %994 = vmatpush1.msra.mxu0 %v977
    %995 = vmatprep.subr.mxu0 0.0
    %996 = vmatpush1.msra.mxu0 %v978
    %997 = vmatprep.subr.mxu0 0.0
    %998 = vmatpush1.msra.mxu0 %v979
    %999 = vmatprep.subr.mxu0 0.0
    %1000 = vmatpush1.msra.mxu0 %v980
    %1001 = vmatprep.subr.mxu0 0.0
    %1002 = vmatpush1.msra.mxu0 %v981
    %1003 = vmatprep.subr.mxu0 0.0
    %1004 = vmatpush1.msra.mxu0 %v982
    %1005 = vmatprep.subr.mxu0 0.0
    %1006 = vmatpush1.msra.mxu0 %v983
    %1007 = vmatprep.subr.mxu0 0.0
    %1008 = vmatpush1.msra.mxu0 %v984
    %1009 = vmatprep.subr.mxu0 0.0
    %1010 = vmatpush1.msra.mxu0 %v985
    %1011 = vmatprep.subr.mxu0 0.0
    %1012 = vmatpush1.msra.mxu0 %v986
    %1013 = vmatprep.subr.mxu0 0.0
    %1014 = vmatpush1.msra.mxu0 %v987
    %1015 = vmatprep.subr.mxu0 0.0
    %1016 = vmatpush1.msra.mxu0 %v988
    %1017 = vmatprep.subr.mxu0 0.0
    %1018 = vmatpush1.msra.mxu0 %v989
    %1019 = vmatprep.subr.mxu0 0.0
    %1020 = vmatpush1.msra.mxu0 %v990
    %1021 = vmatprep.subr.mxu0 0.0
    %1022 = vmatpush1.msra.mxu0 %v991
    %1023 = vmatprep.subr.mxu0 0.0
    %1024 = vmatpush1.msra.mxu0 %v992
    %1025 = vmatprep.subr.mxu0 0.0
    %1026 = vmatpush1.msra.mxu0 0.0
    %1027 = vmatprep.subr.mxu0 0.0
    %1028 = vmatpush1.msra.mxu0 0.0
    %1029 = vmatprep.subr.mxu0 0.0
    %1030 = vmatpush1.msra.mxu0 0.0
    %1031 = vmatprep.subr.mxu0 0.0
    %1032 = vmatpush1.msra.mxu0 0.0
    %1033 = vmatprep.subr.mxu0 0.0
    %1034 = vmatpush1.msra.mxu0 0.0
    %1035 = vmatprep.subr.mxu0 0.0
    %1036 = vmatpush1.msra.mxu0 0.0
    %1037 = vmatprep.subr.mxu0 0.0
    %1038 = vmatpush1.msra.mxu0 0.0
    %1039 = vmatprep.subr.mxu0 0.0
    %1040 = vmatpush1.msra.mxu0 0.0
    %1041 = vmatprep.subr.mxu0 0.0
    %1042 = vmatpush1.msra.mxu0 0.0
    %1043 = vmatprep.subr.mxu0 0.0
    %1044 = vmatpush1.msra.mxu0 0.0
    %1045 = vmatprep.subr.mxu0 0.0
    %1046 = vmatpush1.msra.mxu0 0.0
    %1047 = vmatprep.subr.mxu0 0.0
    %1048 = vmatpush1.msra.mxu0 0.0
    %1049 = vmatprep.subr.mxu0 0.0
    %1050 = vmatpush1.msra.mxu0 0.0
    %1051 = vmatprep.subr.mxu0 0.0
    %1052 = vmatpush1.msra.mxu0 0.0
    %1053 = vmatprep.subr.mxu0 0.0
    %1054 = vmatpush1.msra.mxu0 0.0
    %1055 = vmatprep.subr.mxu0 0.0
    %1056 = vmatpush1.msra.mxu0 0.0
    %1057 = vmatprep.mubr.f32.mxu0 0.0
    %1058 = vmatmul.mubr.f32.gmra.mrb[0].mxu0 %v976
    %v1059 = vpop.f32.mrb[0].mxu0
    %v1060 = vadd.f32 0.0, %v1059
    %v1061 = vpop.f32.mrb[0].mxu0
    %1062 = vdwg.mxu0
    %v1063 = vrcp.pop 512.0
    %v1064 = vmul.f32 %v1060, %v1063
    %v1065 = vld [vmem:[%s10] sm:$0xf]
    %vm1066 = vcmask 31744
    %v1068 = vsel %vm1066, %v1064, 0
    %vm1070 = vcmask 1043456
    %v1072 = vsel %vm1070, %v1065, 0
    %1074 = vmatprep.subr.mxu0 0.0
    %1075 = vmatpush1.msra.mxu0 %v1072
    %1076 = vmatprep.subr.mxu0 0.0
    %1077 = vmatpush1.msra.mxu0 0.0
    %1078 = vmatprep.subr.mxu0 0.0
    %1079 = vmatpush1.msra.mxu0 0.0
    %1080 = vmatprep.subr.mxu0 0.0
    %1081 = vmatpush1.msra.mxu0 0.0
    %1082 = vmatprep.subr.mxu0 0.0
    %1083 = vmatpush1.msra.mxu0 0.0
    %1084 = vmatprep.subr.mxu0 0.0
    %1085 = vmatpush1.msra.mxu0 0.0
    %1086 = vmatprep.subr.mxu0 0.0
    %1087 = vmatpush1.msra.mxu0 0.0
    %1088 = vmatprep.subr.mxu0 0.0
    %1089 = vmatpush1.msra.mxu0 0.0
    %1090 = vmatprep.subr.mxu0 0.0
    %1091 = vmatpush1.msra.mxu0 0.0
    %1092 = vmatprep.subr.mxu0 0.0
    %1093 = vmatpush1.msra.mxu0 0.0
    %1094 = vmatprep.subr.mxu0 0.0
    %1095 = vmatpush1.msra.mxu0 0.0
    %1096 = vmatprep.subr.mxu0 0.0
    %1097 = vmatpush1.msra.mxu0 0.0
    %1098 = vmatprep.subr.mxu0 0.0
    %1099 = vmatpush1.msra.mxu0 0.0
    %1100 = vmatprep.subr.mxu0 0.0
    %1101 = vmatpush1.msra.mxu0 0.0
    %1102 = vmatprep.subr.mxu0 0.0
    %1103 = vmatpush1.msra.mxu0 0.0
    %1104 = vmatprep.subr.mxu0 0.0
    %1105 = vmatpush1.msra.mxu0 0.0
    %1106 = vmatprep.subr.mxu0 0.0
    %1107 = vmatpush1.msra.mxu0 0.0
    %1108 = vmatprep.subr.mxu0 0.0
    %1109 = vmatpush1.msra.mxu0 0.0
    %1110 = vmatprep.subr.mxu0 0.0
    %1111 = vmatpush1.msra.mxu0 0.0
    %1112 = vmatprep.subr.mxu0 0.0
    %1113 = vmatpush1.msra.mxu0 0.0
    %1114 = vmatprep.subr.mxu0 0.0
    %1115 = vmatpush1.msra.mxu0 0.0
    %1116 = vmatprep.subr.mxu0 0.0
    %1117 = vmatpush1.msra.mxu0 0.0
    %1118 = vmatprep.subr.mxu0 0.0
    %1119 = vmatpush1.msra.mxu0 0.0
    %1120 = vmatprep.subr.mxu0 0.0
    %1121 = vmatpush1.msra.mxu0 0.0
    %1122 = vmatprep.subr.mxu0 0.0
    %1123 = vmatpush1.msra.mxu0 0.0
    %1124 = vmatprep.subr.mxu0 0.0
    %1125 = vmatpush1.msra.mxu0 0.0
    %1126 = vmatprep.subr.mxu0 0.0
    %1127 = vmatpush1.msra.mxu0 0.0
    %1128 = vmatprep.subr.mxu0 0.0
    %1129 = vmatpush1.msra.mxu0 0.0
    %1130 = vmatprep.subr.mxu0 0.0
    %1131 = vmatpush1.msra.mxu0 0.0
    %1132 = vmatprep.subr.mxu0 0.0
    %1133 = vmatpush1.msra.mxu0 0.0
    %1134 = vmatprep.subr.mxu0 0.0
    %1135 = vmatpush1.msra.mxu0 0.0
    %1136 = vmatprep.subr.mxu0 0.0
    %1137 = vmatpush1.msra.mxu0 0.0
    %1138 = vmatprep.mubr.f32.mxu0 0.0
    %1139 = vmatmul.mubr.f32.gmra.mrb[0].mxu0 %v1068
    %v1140 = vpop.f32.mrb[0].mxu0
    %v1141 = vadd.f32 0.0, %v1140
    %v1142 = vpop.f32.mrb[0].mxu0
    %1143 = vdwg.mxu0
    %v1144 = vlaneseq
    %v1145 = vshrl.u32 %v1144, 7
    %v1146 = vsub.s32 0, %v1145
    %v1147 = vrot.slane %v1141, %v1146
    %v1148 = vsub.f32 %v968, %v1147
    %v1149 = vsub.f32 %v969, %v1147
    %v1150 = vmul.f32 %v1148, %v1148
    %v1151 = vmul.f32 %v1149, %v1149
    %v1152 = vadd.f32 %v1150, %v1151
    %v1153 = vrot.slane %v1152, 4
    %v1154 = vadd.f32 %v1152, %v1153
    %v1155 = vrot.slane %v1154, 2
    %v1156 = vadd.f32 %v1154, %v1155
    %v1157 = vrot.slane %v1156, 1
    %v1158 = vadd.f32 %v1156, %v1157
    %1159 = vmatprep.subr.mxu0 0.0
    %1160 = vmatpush1.msra.mxu0 %v977
    %1161 = vmatprep.subr.mxu0 0.0
    %1162 = vmatpush1.msra.mxu0 %v978
    %1163 = vmatprep.subr.mxu0 0.0
    %1164 = vmatpush1.msra.mxu0 %v979
    %1165 = vmatprep.subr.mxu0 0.0
    %1166 = vmatpush1.msra.mxu0 %v980
    %1167 = vmatprep.subr.mxu0 0.0
    %1168 = vmatpush1.msra.mxu0 %v981
    %1169 = vmatprep.subr.mxu0 0.0
    %1170 = vmatpush1.msra.mxu0 %v982
    %1171 = vmatprep.subr.mxu0 0.0
    %1172 = vmatpush1.msra.mxu0 %v983
    %1173 = vmatprep.subr.mxu0 0.0
    %1174 = vmatpush1.msra.mxu0 %v984
    %1175 = vmatprep.subr.mxu0 0.0
    %1176 = vmatpush1.msra.mxu0 %v985
    %1177 = vmatprep.subr.mxu0 0.0
    %1178 = vmatpush1.msra.mxu0 %v986
    %1179 = vmatprep.subr.mxu0 0.0
    %1180 = vmatpush1.msra.mxu0 %v987
    %1181 = vmatprep.subr.mxu0 0.0
    %1182 = vmatpush1.msra.mxu0 %v988
    %1183 = vmatprep.subr.mxu0 0.0
    %1184 = vmatpush1.msra.mxu0 %v989
    %1185 = vmatprep.subr.mxu0 0.0
    %1186 = vmatpush1.msra.mxu0 %v990
    %1187 = vmatprep.subr.mxu0 0.0
    %1188 = vmatpush1.msra.mxu0 %v991
    %1189 = vmatprep.subr.mxu0 0.0
    %1190 = vmatpush1.msra.mxu0 %v992
    %1191 = vmatprep.subr.mxu0 0.0
    %1192 = vmatpush1.msra.mxu0 0.0
    %1193 = vmatprep.subr.mxu0 0.0
    %1194 = vmatpush1.msra.mxu0 0.0
    %1195 = vmatprep.subr.mxu0 0.0
    %1196 = vmatpush1.msra.mxu0 0.0
    %1197 = vmatprep.subr.mxu0 0.0
    %1198 = vmatpush1.msra.mxu0 0.0
    %1199 = vmatprep.subr.mxu0 0.0
    %1200 = vmatpush1.msra.mxu0 0.0
    %1201 = vmatprep.subr.mxu0 0.0
    %1202 = vmatpush1.msra.mxu0 0.0
    %1203 = vmatprep.subr.mxu0 0.0
    %1204 = vmatpush1.msra.mxu0 0.0
    %1205 = vmatprep.subr.mxu0 0.0
    %1206 = vmatpush1.msra.mxu0 0.0
    %1207 = vmatprep.subr.mxu0 0.0
    %1208 = vmatpush1.msra.mxu0 0.0
    %1209 = vmatprep.subr.mxu0 0.0
    %1210 = vmatpush1.msra.mxu0 0.0
    %1211 = vmatprep.subr.mxu0 0.0
    %1212 = vmatpush1.msra.mxu0 0.0
    %1213 = vmatprep.subr.mxu0 0.0
    %1214 = vmatpush1.msra.mxu0 0.0
    %1215 = vmatprep.subr.mxu0 0.0
    %1216 = vmatpush1.msra.mxu0 0.0
    %1217 = vmatprep.subr.mxu0 0.0
    %1218 = vmatpush1.msra.mxu0 0.0
    %1219 = vmatprep.subr.mxu0 0.0
    %1220 = vmatpush1.msra.mxu0 0.0
    %1221 = vmatprep.subr.mxu0 0.0
    %1222 = vmatpush1.msra.mxu0 0.0
    %1223 = vmatprep.mubr.f32.mxu0 0.0
    %1224 = vmatmul.mubr.f32.gmra.mrb[0].mxu0 %v1158
    %v1225 = vpop.f32.mrb[0].mxu0
    %v1226 = vadd.f32 0.0, %v1225
    %v1227 = vpop.f32.mrb[0].mxu0
    %1228 = vdwg.mxu0
    %v1229 = vmul.f32 %v1226, %v1063
    %v1230 = vld [vmem:[%s7] sm:$0x1]
    %v1231 = vadd.f32 %v1229, 1e-05
    %v1232 = vrsqrt.pop %v1231
    %v1233 = vmul.f32 %v1230, %v1232
    %v1234 = vld [vmem:[%s8] sm:$0x1]
    %v1236 = vlaneseq
    %v1237 = vshrl.u32 %v1236, 7
    %v1238 = vsub.s32 0, %v1237
    %v1239 = vrot.slane %v1234, %v1238
    %vm1241 = vcmask 1040384
    %v1242 = vsel %vm1241, %v1233, %v1239
    %v1244 = vsel %vm1066, %v1242, 0
    %1246 = vmatprep.subr.mxu0 0.0
    %1247 = vmatpush1.msra.mxu0 %v1072
    %1248 = vmatprep.subr.mxu0 0.0
    %1249 = vmatpush1.msra.mxu0 0.0
    %1250 = vmatprep.subr.mxu0 0.0
    %1251 = vmatpush1.msra.mxu0 0.0
    %1252 = vmatprep.subr.mxu0 0.0
    %1253 = vmatpush1.msra.mxu0 0.0
    %1254 = vmatprep.subr.mxu0 0.0
    %1255 = vmatpush1.msra.mxu0 0.0
    %1256 = vmatprep.subr.mxu0 0.0
    %1257 = vmatpush1.msra.mxu0 0.0
    %1258 = vmatprep.subr.mxu0 0.0
    %1259 = vmatpush1.msra.mxu0 0.0
    %1260 = vmatprep.subr.mxu0 0.0
    %1261 = vmatpush1.msra.mxu0 0.0
    %1262 = vmatprep.subr.mxu0 0.0
    %1263 = vmatpush1.msra.mxu0 0.0
    %1264 = vmatprep.subr.mxu0 0.0
    %1265 = vmatpush1.msra.mxu0 0.0
    %1266 = vmatprep.subr.mxu0 0.0
    %1267 = vmatpush1.msra.mxu0 0.0
    %1268 = vmatprep.subr.mxu0 0.0
    %1269 = vmatpush1.msra.mxu0 0.0
    %1270 = vmatprep.subr.mxu0 0.0
    %1271 = vmatpush1.msra.mxu0 0.0
    %1272 = vmatprep.subr.mxu0 0.0
    %1273 = vmatpush1.msra.mxu0 0.0
    %1274 = vmatprep.subr.mxu0 0.0
    %1275 = vmatpush1.msra.mxu0 0.0
    %1276 = vmatprep.subr.mxu0 0.0
    %1277 = vmatpush1.msra.mxu0 0.0
    %1278 = vmatprep.subr.mxu0 0.0
    %1279 = vmatpush1.msra.mxu0 0.0
    %1280 = vmatprep.subr.mxu0 0.0
    %1281 = vmatpush1.msra.mxu0 0.0
    %1282 = vmatprep.subr.mxu0 0.0
    %1283 = vmatpush1.msra.mxu0 0.0
    %1284 = vmatprep.subr.mxu0 0.0
    %1285 = vmatpush1.msra.mxu0 0.0
    %1286 = vmatprep.subr.mxu0 0.0
    %1287 = vmatpush1.msra.mxu0 0.0
    %1288 = vmatprep.subr.mxu0 0.0
    %1289 = vmatpush1.msra.mxu0 0.0
    %1290 = vmatprep.subr.mxu0 0.0
    %1291 = vmatpush1.msra.mxu0 0.0
    %1292 = vmatprep.subr.mxu0 0.0
    %1293 = vmatpush1.msra.mxu0 0.0
    %1294 = vmatprep.subr.mxu0 0.0
    %1295 = vmatpush1.msra.mxu0 0.0
    %1296 = vmatprep.subr.mxu0 0.0
    %1297 = vmatpush1.msra.mxu0 0.0
    %1298 = vmatprep.subr.mxu0 0.0
    %1299 = vmatpush1.msra.mxu0 0.0
    %1300 = vmatprep.subr.mxu0 0.0
    %1301 = vmatpush1.msra.mxu0 0.0
    %1302 = vmatprep.subr.mxu0 0.0
    %1303 = vmatpush1.msra.mxu0 0.0
    %1304 = vmatprep.subr.mxu0 0.0
    %1305 = vmatpush1.msra.mxu0 0.0
    %1306 = vmatprep.subr.mxu0 0.0
    %1307 = vmatpush1.msra.mxu0 0.0
    %1308 = vmatprep.subr.mxu0 0.0
    %1309 = vmatpush1.msra.mxu0 0.0
    %1310 = vmatprep.mubr.f32.mxu0 0.0
    %1311 = vmatmul.mubr.f32.gmra.mrb[0].mxu0 %v1244
    %v1312 = vpop.f32.mrb[0].mxu0
    %v1313 = vadd.f32 0.0, %v1312
    %v1314 = vpop.f32.mrb[0].mxu0
    %1315 = vdwg.mxu0
    %v1316 = vlaneseq
    %v1317 = vshrl.u32 %v1316, 7
    %v1318 = vsub.s32 0, %v1317
    %v1319 = vrot.slane %v1313, %v1318
    %v1320 = vmul.f32 %v1148, %v1319
    %v1321 = vmul.f32 %v1149, %v1319
    %v1322 = vlaneseq
    %v1323 = vshrl.u32 %v1322, 7
    %v1324 = vsub.s32 1, %v1323
    %v1325 = vrot.slane %v1313, %v1324
    %v1326 = vadd.f32 %v1320, %v1325
    %v1327 = vadd.f32 %v1321, %v1325
    %v1328 = vadd.f32 %v1326, %v82
    %v1329 = vadd.f32 %v1327, %v83
    %v1330 = vmax.f32 %v1328, 0.0
    %v1331 = vmax.f32 %v1329, 0.0
    %1332 = vst [vmem:[#allocation9] sm:$0xff] %v1330
    %1333 = vst [vmem:[#allocation9 + $0x8] sm:$0xff] %v1331
    // Predicated region
    $region58: #{tpu_custom_call.1} parent=1 // pred_check
      _
    $region59: #{tpu_custom_call.1} parent=1 // pred_check_branch
      %1335 = sbr.rel (0) target = $region61
    $region60: #{tpu_custom_call.1} parent=1 // pred_region
      %s1337 = ssub.s32 256, 256
      %1338 = vsyncadd [#allocation5], %s1337
      %s1339 = sshll.u32 [#allocation9], 4
      %s1340 = int_to_ptr.vmem [resolvable:$true] %s1339
      %1345 = dma.vmem_to_hbm [thread:$0]  %s1340, 256, %s11, [#allocation5], 128, 128, 8
    $region61: #{tpu_custom_call.1} parent=1 // pred_fallthru
      _
    // Predicated region
    $region62: #{tpu_custom_call.1} parent=1 // pred_check
      _
    $region63: #{tpu_custom_call.1} parent=1 // pred_check_branch
      %1347 = sbr.rel (0) target = $region65
    $region64: #{tpu_custom_call.1} parent=1 // pred_region
      %1348 = dma.done [#allocation5], 256
    $region65: #{tpu_custom_call.1} parent=1 // pred_fallthru
      _
    %1349 = vsyncpa [#allocation4], 1
    %1350 = vsyncpa [#allocation7], 1
    %1351 = vsyncpa [#allocation5], 1

</llo_original>
